<compile_context>
chip_gen: v7x
topology: tpu7x:2x2x1
jax: 0.10.0
libtpu: 0.0.40
codegen_flags: <defaults>
</compile_context>

<pallas_src>
import functools
import math

import jax
import jax.numpy as jnp
from jax import lax
from jax.experimental import pallas as pl
from jax.experimental.pallas import tpu as pltpu


def _knn_edgeconv_kernel(xn_ref, keysT_ref, y_ref, z_ref, o_ref, *, k, idx_scale):
    """Fused kNN selection + EdgeConv aggregation for one (batch, row-tile) step."""
    q = xn_ref[0]                    # (T, Cp)  normalized query rows
    keysT = keysT_ref[0]             # (Cp, N)  all normalized keys, pre-transposed
    y_all = y_ref[0]                 # (N, Cp)  gather table  y = x @ Wd
    t_rows = q.shape[0]
    n = keysT.shape[-1]
    cp = y_all.shape[-1]
    gdt = y_all.dtype

    # Gram slab for this row tile (MXU, f32 accumulation; plain contraction, no
    # per-tile transpose of the key matrix).
    sim = jnp.dot(q, keysT, preferred_element_type=jnp.float32)          # (T, N) f32

    # Pack (similarity, column) into one sortable int32 key:
    #   sim in [-1, 1+eps]  ->  fixed = floor((sim + 1.5) * idx_scale)  >= 1
    #   key   = fixed * N + (N - 1 - col)
    # Keys are unique per column, so a single row-max gives both the best value and
    # an exact one-hot selector; tie-break = smallest column (matches lax.top_k).
    col = lax.broadcasted_iota(jnp.int32, (t_rows, n), 1)
    fixed = ((sim + 1.5) * idx_scale).astype(jnp.int32)   # positive -> trunc == floor
    comb = fixed * n + (n - 1 - col)

    masked_val = jnp.iinfo(jnp.int32).min + 1             # < any valid (positive) key

    def body(_, carry):
        comb_c, ymax_c = carry
        cmax = jnp.max(comb_c, axis=-1, keepdims=True)     # ONE XLU reduction / step
        sel = comb_c == cmax                               # exact one-hot per row
        onehot = jnp.where(sel, 1.0, 0.0).astype(gdt)
        # Row gather of y via a one-hot matmul (MXU; bf16 operands on the fast path,
        # exact because exactly one 1.0 per row).
        # TODO(synk): replace with a native dynamic row gather once Mosaic supports it.
        yj = jnp.dot(onehot, y_all, preferred_element_type=jnp.float32)  # (T, Cp) f32
        return jnp.where(sel, masked_val, comb_c), jnp.maximum(ymax_c, yj)

    ymax0 = jnp.full((t_rows, cp), -jnp.inf, jnp.float32)
    _, ymax = lax.fori_loop(0, k, body, (comb, ymax0))

    # max_j ReLU(Wi x_i + Wd (x_j - x_i) + b) = ReLU(z_i + max_j y_j)
    o_ref[0] = jnp.maximum(z_ref[0] + ymax, 0.0).astype(o_ref.dtype)


def _pick_row_tile(n, max_tile):
    """Largest multiple-of-8 divisor of n (<= max_tile); else the full extent n."""
    start = min(max_tile, n)
    start -= start % 8
    for t in range(start, 7, -8):
        if n % t == 0:
            return t
    return n


def _vmem_limit_bytes(n, cp, tile_n, key_bytes):
    """Budget derived from the actual (double-buffered) blocks + compute temps."""
    blocks = 2 * (tile_n * cp * key_bytes     # xn query tile
                  + cp * n * key_bytes        # transposed keys (whole batch)
                  + n * cp * key_bytes        # gather table y (whole batch)
                  + tile_n * cp * 4           # z tile
                  + tile_n * cp * 4)          # output tile
    temps = 5 * tile_n * n * 4 + 8 * tile_n * cp * 4       # sim/comb/col/sel slabs etc.
    # Floor covers Mosaic internal scratch at tiny sizes; the cap stays below
    # v5e/v6e's 128 MiB physical VMEM (v7x physical is only 64 MiB — re-check there
    # before pushing N/tile_n much larger).
    return int(min(max(blocks + temps + (8 << 20), 32 << 20), 100 << 20))


def grapher_forward(x_nchw, weight, bias, knn=9, *, use_bf16=True, max_row_tile=256):
    """Grapher forward (conv='edge', act='relu', norm=None, dilation=1, r=1).

    x_nchw: (B, C, H, W) f32; weight: (C, 2C) (= Conv2d(2C, C, 1).weight squeezed);
    bias: (C,).  Returns (B, C, H, W) f32.

    use_bf16:     bf16 MXU operands (f32 accumulation) for the Gram / gather /
                  precompute matmuls — the fast path on v5e/v6e/v7x.  The one-hot
                  gather stays exact; only the stored y values and the neighbour
                  ranking are bf16-quantized.  Set False for f32-exact verification.
    max_row_tile: query-row tile.  256 fills the 256-wide MXU on v6e/v7x; use 128 on
                  v5e (128-wide MXU).  VMEM note: v7x has 64 MiB, LESS than v5e/v6e
                  (128 MiB); the per-step footprint scales with tile_n*N + Cp*N.
    """
    B, C, H, W = x_nchw.shape
    N = H * W
    if not (1 <= knn <= N):
        raise ValueError(f"knn={knn} must satisfy 1 <= knn <= N={N}")
    Cp = ((C + 127) // 128) * 128             # pad channels to a full lane width
    tile_n = _pick_row_tile(N, max_row_tile)
    n_tiles = N // tile_n

    cdt = jnp.bfloat16 if use_bf16 else jnp.float32

    # ---- per-batch precompute, hoisted out of the kernel (bf16 MXU operands with
    # f32 accumulation on the fast path).  Channel padding is inert: zero features,
    # zero weight rows/cols, zero bias => zero output lanes (sliced off below). ----
    x = jnp.transpose(x_nchw.reshape(B, C, N), (0, 2, 1)).astype(jnp.float32)    # (B,N,C)
    xp = jnp.pad(x, ((0, 0), (0, 0), (0, Cp - C)))                               # (B,N,Cp)

    wt = jnp.transpose(weight).astype(jnp.float32)                               # (2C, C)
    wi = jnp.zeros((Cp, Cp), jnp.float32).at[:C, :C].set(wt[:C])                 # acts on x_i
    wd = jnp.zeros((Cp, Cp), jnp.float32).at[:C, :C].set(wt[C:])                 # acts on (x_j - x_i)
    b2 = jnp.zeros((Cp,), jnp.float32).at[:C].set(bias.astype(jnp.float32))

    sq = jnp.sum(xp * xp, axis=-1, keepdims=True)
    xn = (xp * lax.rsqrt(jnp.maximum(sq, 1e-24))).astype(cdt)                    # F.normalize
    xnT = jnp.transpose(xn, (0, 2, 1))               # (B,Cp,N): keys transposed ONCE per batch
    xc = xp.astype(cdt)
    y = jnp.einsum('bnc,cd->bnd', xc, wd.astype(cdt),
                   preferred_element_type=jnp.float32).astype(cdt)               # gather table
    z = jnp.einsum('bnc,cd->bnd', xc, (wi - wd).astype(cdt),
                   preferred_element_type=jnp.float32) + b2                      # f32 epilogue term

    # Fixed-point scale for the packed (similarity, column) key:
    # (sim + 1.5) * scale * N must stay below 2^31.
    idx_scale = float(1 << max(1, 29 - math.ceil(math.log2(N))))

    key_bytes = 2 if use_bf16 else 4
    vmem_limit = _vmem_limit_bytes(N, Cp, tile_n, key_bytes)

    out_p = pl.pallas_call(
        functools.partial(_knn_edgeconv_kernel, k=knn, idx_scale=idx_scale),
        out_shape=jax.ShapeDtypeStruct((B, N, Cp), jnp.float32),
        grid_spec=pltpu.PrefetchScalarGridSpec(
            num_scalar_prefetch=0,
            grid=(B, n_tiles),
            in_specs=[
                pl.BlockSpec((1, tile_n, Cp), lambda b, t: (b, t, 0)),   # xn: query rows
                pl.BlockSpec((1, Cp, N),      lambda b, t: (b, 0, 0)),   # xn^T: all keys
                pl.BlockSpec((1, N, Cp),      lambda b, t: (b, 0, 0)),   # y = x @ Wd
                pl.BlockSpec((1, tile_n, Cp), lambda b, t: (b, t, 0)),   # z = x @ (Wi-Wd) + b
            ],
            out_specs=pl.BlockSpec((1, tile_n, Cp), lambda b, t: (b, t, 0)),
        ),
        compiler_params=pltpu.CompilerParams(
            # No cross-iteration scratch carry -> both axes parallel
            # (row-tile axis can be sharded across v7x's 2 TensorCores).
            dimension_semantics=("parallel", "parallel"),
            vmem_limit_bytes=vmem_limit,
        ),
    )(xn, xnT, y, z)

    out = out_p[:, :, :C]
    return jnp.transpose(out, (0, 2, 1)).reshape(B, C, H, W)


def _reference(x_nchw, weight, bias, knn):
    """Plain-JAX (XLA) reference of the same forward pass."""
    B, C, H, W = x_nchw.shape
    N = H * W
    x = jnp.transpose(x_nchw.reshape(B, C, N), (0, 2, 1)).astype(jnp.float32)    # (B,N,C)
    xn = x * lax.rsqrt(jnp.maximum(jnp.sum(x * x, -1, keepdims=True), 1e-24))
    sim = jnp.einsum('bnc,bmc->bnm', xn, xn)
    _, idx = lax.top_k(sim, knn)                                                 # (B,N,k)
    wt = jnp.transpose(weight).astype(jnp.float32)                               # (2C,C)

    def one(xb, idxb):
        xj = xb[idxb]                                                            # (N,k,C)
        xi = jnp.broadcast_to(xb[:, None, :], xj.shape)
        feat = jnp.concatenate([xi, xj - xi], axis=-1)                           # (N,k,2C)
        h = jnp.maximum(jnp.einsum('nkd,dc->nkc', feat, wt) + bias, 0.0)
        return jnp.max(h, axis=1)                                                # (N,C)

    out = jax.vmap(one)(x, idx)                                                  # (B,N,C)
    return jnp.transpose(out, (0, 2, 1)).reshape(B, C, H, W)


if __name__ == "__main__":
    B, C, H, W = 2, 16, 16, 16        # N = 256 nodes
    knn = 9

    key = jax.random.PRNGKey(0)
    kx, kw, kb = jax.random.split(key, 3)
    x = jax.random.normal(kx, (B, C, H, W), dtype=jnp.float32)
    # EdgeConv2d's BasicConv([2C, C]): Conv2d(2C, C, 1, bias=True) + ReLU
    weight = jax.random.normal(kw, (C, 2 * C), dtype=jnp.float32) * (1.0 / (2 * C) ** 0.5)
    bias = jax.random.normal(kb, (C,), dtype=jnp.float32) * 0.01

    # Fast path: bf16 MXU operands, tile_n=256 (single row tile).  bf16 similarity
    # can (rarely) flip the k-th neighbour for near-ties, so this path is smoke-
    # tested for shape/finiteness only; numerical equivalence is checked on the
    # f32 path below.
    out = grapher_forward(x, weight, bias, knn=knn)
    jax.block_until_ready(out)
    assert out.shape == (B, C, H, W) and out.dtype == jnp.float32
    assert bool(jnp.all(jnp.isfinite(out)))

    # f32 verification path (also exercises the 2-row-tile grid) vs. plain-JAX
    # reference.  Robust to extremely rare kNN tie-order differences: 99% of the
    # entries must match.
    out_f32 = grapher_forward(x, weight, bias, knn=knn, use_bf16=False, max_row_tile=128)
    ref = _reference(x, weight, bias, knn)
    close = jnp.abs(out_f32 - ref) <= (1e-3 + 1e-3 * jnp.abs(ref))
    frac = float(jnp.mean(close.astype(jnp.float32)))
    assert frac > 0.99, f"f32-path mismatch fraction too high: {1.0 - frac:.5f}"

    print("KERNEL_OK")
</pallas_src>

<mosaic_0001>
module attributes {stable_mosaic.version = 11 : i64} {
  func.func @_knn_edgeconv_kernel(%arg0: i32, %arg1: i32, %arg2: memref<1x256x128xbf16, #tpu.memory_space<vmem>>, %arg3: memref<1x128x256xbf16, #tpu.memory_space<vmem>>, %arg4: memref<1x256x128xbf16, #tpu.memory_space<vmem>>, %arg5: memref<1x256x128xf32, #tpu.memory_space<vmem>>, %arg6: memref<1x256x128xf32, #tpu.memory_space<vmem>>) attributes {dimension_semantics = [#tpu.dimension_semantics<parallel>, #tpu.dimension_semantics<parallel>], iteration_bounds = array<i64: 2, 1>, scalar_prefetch = 0 : i64, scratch_operands = 0 : i64, tpu.core_type = #tpu.core_type<tc>, window_params = [{transform_indices = @transform_0, window_bounds = array<i64: 1, 256, 128>}, {transform_indices = @transform_1, window_bounds = array<i64: 1, 128, 256>}, {transform_indices = @transform_2, window_bounds = array<i64: 1, 256, 128>}, {transform_indices = @transform_3, window_bounds = array<i64: 1, 256, 128>}, {transform_indices = @transform_4, window_bounds = array<i64: 1, 256, 128>}]} {
    %c0 = arith.constant 0 : index
    %c0_0 = arith.constant 0 : index
    %c0_1 = arith.constant 0 : index
    %0 = vector.load %arg2[%c0, %c0_0, %c0_1] : memref<1x256x128xbf16, #tpu.memory_space<vmem>>, vector<1x256x128xbf16>
    %1 = vector.shape_cast %0 : vector<1x256x128xbf16> to vector<256x128xbf16>
    %c0_2 = arith.constant 0 : index
    %c0_3 = arith.constant 0 : index
    %c0_4 = arith.constant 0 : index
    %2 = vector.load %arg3[%c0_2, %c0_3, %c0_4] : memref<1x128x256xbf16, #tpu.memory_space<vmem>>, vector<1x128x256xbf16>
    %3 = vector.shape_cast %2 : vector<1x128x256xbf16> to vector<128x256xbf16>
    %c0_5 = arith.constant 0 : index
    %c0_6 = arith.constant 0 : index
    %c0_7 = arith.constant 0 : index
    %4 = vector.load %arg4[%c0_5, %c0_6, %c0_7] : memref<1x256x128xbf16, #tpu.memory_space<vmem>>, vector<1x256x128xbf16>
    %5 = vector.shape_cast %4 : vector<1x256x128xbf16> to vector<256x128xbf16>
    %cst = arith.constant dense<0.000000e+00> : vector<256x256xf32>
    %6 = tpu.matmul %1, %3, %cst {dimension_numbers = #tpu.dot_dimension_numbers<[1], [0], [0], [1], [0, 0, 1, 1], [], []>} : vector<256x128xbf16>, vector<128x256xbf16>, vector<256x256xf32> -> vector<256x256xf32>
    %7 = tpu.iota {dimensions = array<i32: 1>} : vector<256x256xi32>
    %cst_8 = arith.constant 1.500000e+00 : f32
    %8 = vector.broadcast %cst_8 : f32 to vector<256x256xf32>
    %9 = arith.addf %6, %8 : vector<256x256xf32>
    %cst_9 = arith.constant 0x4A000000 : f32
    %10 = vector.broadcast %cst_9 : f32 to vector<256x256xf32>
    %11 = arith.mulf %9, %10 : vector<256x256xf32>
    %12 = arith.fptosi %11 : vector<256x256xf32> to vector<256x256xi32>
    %c256_i32 = arith.constant 256 : i32
    %13 = vector.broadcast %c256_i32 : i32 to vector<256x256xi32>
    %14 = arith.muli %12, %13 : vector<256x256xi32>
    %c255_i32 = arith.constant 255 : i32
    %15 = vector.broadcast %c255_i32 : i32 to vector<256x256xi32>
    %16 = arith.subi %15, %7 : vector<256x256xi32>
    %17 = arith.addi %14, %16 : vector<256x256xi32>
    %cst_10 = arith.constant 0xFF800000 : f32
    %18 = vector.broadcast %cst_10 : f32 to vector<256x128xf32>
    %c0_i32 = arith.constant 0 : i32
    %c9_i32 = arith.constant 9 : i32
    %19 = arith.addi %c0_i32, %c9_i32 : i32
    %c1_i32 = arith.constant 1 : i32
    %20:2 = scf.for %arg7 = %c0_i32 to %19 step %c1_i32 iter_args(%arg8 = %17, %arg9 = %18) -> (vector<256x256xi32>, vector<256x128xf32>)  : i32 {
      %cst_18 = arith.constant dense<-2147483648> : vector<256xi32>
      %29 = vector.multi_reduction <maxsi>, %arg8, %cst_18 [1] : vector<256x256xi32> to vector<256xi32>
      %30 = vector.shape_cast %29 : vector<256xi32> to vector<256x1xi32>
      %31 = vector.broadcast %30 : vector<256x1xi32> to vector<256x256xi32>
      %32 = arith.cmpi eq, %arg8, %31 : vector<256x256xi32>
      %cst_19 = arith.constant 1.000000e+00 : f32
      %cst_20 = arith.constant 0.000000e+00 : f32
      %33 = vector.broadcast %cst_19 : f32 to vector<256x256xf32>
      %34 = vector.broadcast %cst_20 : f32 to vector<256x256xf32>
      %35 = arith.select %32, %33, %34 : vector<256x256xi1>, vector<256x256xf32>
      %36 = arith.truncf %35 : vector<256x256xf32> to vector<256x256xbf16>
      %cst_21 = arith.constant dense<0.000000e+00> : vector<256x128xf32>
      %37 = tpu.matmul %36, %5, %cst_21 {dimension_numbers = #tpu.dot_dimension_numbers<[1], [0], [0], [1], [0, 0, 1, 1], [], []>} : vector<256x256xbf16>, vector<256x128xbf16>, vector<256x128xf32> -> vector<256x128xf32>
      %c-2147483647_i32 = arith.constant -2147483647 : i32
      %38 = vector.broadcast %c-2147483647_i32 : i32 to vector<256x256xi32>
      %39 = arith.select %32, %38, %arg8 : vector<256x256xi1>, vector<256x256xi32>
      %40 = arith.maximumf %arg9, %37 : vector<256x128xf32>
      scf.yield %39, %40 : vector<256x256xi32>, vector<256x128xf32>
    }
    %c0_11 = arith.constant 0 : index
    %c0_12 = arith.constant 0 : index
    %c0_13 = arith.constant 0 : index
    %21 = vector.load %arg5[%c0_11, %c0_12, %c0_13] : memref<1x256x128xf32, #tpu.memory_space<vmem>>, vector<1x256x128xf32>
    %22 = vector.shape_cast %21 : vector<1x256x128xf32> to vector<256x128xf32>
    %23 = arith.addf %22, %20#1 : vector<256x128xf32>
    %cst_14 = arith.constant 0.000000e+00 : f32
    %24 = vector.broadcast %cst_14 : f32 to vector<256x128xf32>
    %25 = arith.maximumf %23, %24 : vector<256x128xf32>
    %c0_15 = arith.constant 0 : index
    %c0_16 = arith.constant 0 : index
    %c0_17 = arith.constant 0 : index
    %26 = vector.load %arg6[%c0_15, %c0_16, %c0_17] : memref<1x256x128xf32, #tpu.memory_space<vmem>>, vector<1x256x128xf32>
    %27 = vector.shape_cast %26 : vector<1x256x128xf32> to vector<256x128xf32>
    %28 = vector.shape_cast %25 : vector<256x128xf32> to vector<1x256x128xf32>
    tpu.vector_store %arg6[%c0_15, %c0_16, %c0_17], %28 {strides = array<i32>} : memref<1x256x128xf32, #tpu.memory_space<vmem>>, vector<1x256x128xf32>,
    return
  }
  func.func @transform_0(%arg0: i32, %arg1: i32) -> (i32, i32, i32) {
    %c0_i32 = arith.constant 0 : i32
    %c0_i32_0 = arith.constant 0 : i32
    return %arg0, %arg1, %c0_i32 : i32, i32, i32
  }
  func.func @transform_1(%arg0: i32, %arg1: i32) -> (i32, i32, i32) {
    %c0_i32 = arith.constant 0 : i32
    %c0_i32_0 = arith.constant 0 : i32
    %c0_i32_1 = arith.constant 0 : i32
    return %arg0, %c0_i32, %c0_i32_0 : i32, i32, i32
  }
  func.func @transform_2(%arg0: i32, %arg1: i32) -> (i32, i32, i32) {
    %c0_i32 = arith.constant 0 : i32
    %c0_i32_0 = arith.constant 0 : i32
    %c0_i32_1 = arith.constant 0 : i32
    return %arg0, %c0_i32, %c0_i32_0 : i32, i32, i32
  }
  func.func @transform_3(%arg0: i32, %arg1: i32) -> (i32, i32, i32) {
    %c0_i32 = arith.constant 0 : i32
    %c0_i32_0 = arith.constant 0 : i32
    return %arg0, %arg1, %c0_i32 : i32, i32, i32
  }
  func.func @transform_4(%arg0: i32, %arg1: i32) -> (i32, i32, i32) {
    %c0_i32 = arith.constant 0 : i32
    %c0_i32_0 = arith.constant 0 : i32
    return %arg0, %arg1, %c0_i32 : i32, i32, i32
  }
}

</mosaic_0001>

<llo_original>
// kernel: tpu_custom_call.1
$region0: #{tpu_custom_call.1}
  #allocation0 [shape = 'u32[]', space=smem, size = 0x4, offset = 0x4, fixed_abs, tag = 'smem constant byte address 0x4 - core index']
  #allocation1 [shape = 'u32[144,128]{1,0:T(1,128)}', space=vmem, size = 0x12000, scoped, tag = 'internal scratch']
  %s0 = inlined_call_operand.hbm [shape: bf16[2,256,128], index: 0, kind: input, shape index: {}]
  %s1 = inlined_call_operand.hbm [shape: bf16[2,128,256], index: 1, kind: input, shape index: {}]
  %s2 = inlined_call_operand.hbm [shape: bf16[2,256,128], index: 2, kind: input, shape index: {}]
  %s3 = inlined_call_operand.hbm [shape: f32[2,256,128], index: 3, kind: input, shape index: {}]
  %s4 = inlined_call_operand.hbm [shape: f32[2,256,128], index: 4, kind: output, shape index: {}]
  %s5 = sld [smem:[#allocation0]]
  $region72: #{tpu_custom_call.1} parent=0
    _
  %s7 = ssub.s32 1, %s5
  %s8 = scalar_select 0, %s7, %s5
  $region1: #{tpu_custom_call.1} parent=0
    #allocation2 [shape = 'u8[131072]{0}', space=vmem, size = 0x20000, scoped, tag = 'input window, operand 0']
    #allocation3 [shape = 's32[2]{0}', space=sflag, size = 0x8, scoped, tag = 'scoped memory for tpu_custom_call.1']
    #allocation4 [shape = 's32[2]{0}', space=sflag, size = 0x8, scoped, tag = 'scoped memory for tpu_custom_call.1']
    #allocation5 [shape = 'u8[131072]{0}', space=vmem, size = 0x20000, scoped, tag = 'input window, operand 1']
    #allocation6 [shape = 's32[2]{0}', space=sflag, size = 0x8, scoped, tag = 'scoped memory for tpu_custom_call.1']
    #allocation7 [shape = 'u8[131072]{0}', space=vmem, size = 0x20000, scoped, tag = 'input window, operand 2']
    #allocation8 [shape = 'u8[262144]{0}', space=vmem, size = 0x40000, scoped, tag = 'input window, operand 3']
    #allocation9 [shape = 's32[2]{0}', space=sflag, size = 0x8, scoped, tag = 'scoped memory for tpu_custom_call.1']
    #allocation10 [shape = 'u8[262144]{0}', space=vmem, size = 0x40000, scoped, tag = 'output window, operand 0']
    %9 = vsyncpa [#allocation3], 0
    %s10 = scalar_lea.sflag [#allocation3], 1
    %11 = vsyncpa %s10, 0
    %12 = vsyncpa [#allocation6], 0
    %s13 = scalar_lea.sflag [#allocation6], 1
    %14 = vsyncpa %s13, 0
    %15 = vsyncpa [#allocation9], 0
    %s16 = scalar_lea.sflag [#allocation9], 1
    %17 = vsyncpa %s16, 0
    %18 = vsyncpa [#allocation4], 0
    %s19 = scalar_lea.sflag [#allocation4], 1
    %20 = vsyncpa %s19, 0
    loop: start=0, step=1, limit=4
    $region2: #{tpu_custom_call.1} parent=1 // loop_pre_header
      _
    $region3: #{tpu_custom_call.1} parent=1 // loop_header
      %s22 = sphi 0, %s26
      %p23 = scmp.ge.s32.totalorder %s22, 4
      %s29 = sphi 0, %s41
      %s30 = sphi 0, %s37
      %s31 = sphi 0, %s29
      %s32 = sphi 0, %s30
      %s33 = sphi 0, %s31
      %s34 = sphi 0, %s32
      %s46 = sphi 0, %s48
      %s49 = sphi 0, %s46
      %s50 = sphi 0, %s49
      %s66 = sphi 0, %s50
      %s72 = sphi 0, %s74
      %s75 = sphi 0, %s72
      %s76 = sphi 0, %s75
      %s92 = sphi 0, %s76
      %s98 = sphi 0, %s100
      %s101 = sphi 0, %s98
      %s102 = sphi 0, %s101
      %s118 = sphi 0, %s102
      %s126 = sphi 0, %s128
      %s129 = sphi 0, %s126
      %s130 = sphi 0, %s129
      %s146 = sphi 0, %s130
      %s154 = sphi 0, %s156
      %s157 = sphi 0, %s154
      %s158 = sphi 0, %s157
      %s174 = sphi 0, %s158
    $region4: #{tpu_custom_call.1} parent=1 // loop_header_branch
      %25 = sbr.rel (%p23) target = $region8
    $region5: #{tpu_custom_call.1} parent=1 // loop_body
      %s27 = ssub.s32 %s22, 1
      %s28 = ssub.s32 %s22, 2
      %s35 = sadd.s32 1, %s30
      %p36 = scmp.ge.s32.totalorder %s35, 1
      %s37 = scalar_select %p36, 0, %s35
      %s38 = sadd.s32 1, %s29
      %s39 = scalar_select %p36, %s38, %s29
      %p40 = scmp.ge.s32.totalorder %s39, 2
      %s41 = scalar_select %p40, 0, %s39
      %s42 = ssub.s32 %s29, %s41
      %s43 = ssub.s32 %s30, %s37
      %s44 = sor.u32 %s42, %s43
      %p45 = scmp.eq.s32.totalorder %s44, 0
      %s47 = sadd.s32 %s46, 1
      %s48 = scalar_select %p45, %s46, %s47
      %p51 = pneg %p45
      %p52 = scmp.eq.s32.totalorder %s22, 1
      %p53 = por %p51, %p52
      %p54 = scmp.ne.s32.totalorder %s46, %s49
      %p55 = scmp.eq.s32.totalorder %s22, 0
      %p56 = por %p54, %p55
      %p57 = scmp.ne.s32.totalorder %s46, %s49
      %p58 = scmp.eq.s32.totalorder %s27, 1
      %p59 = por %p57, %p58
      %p60 = scmp.ne.s32.totalorder %s49, %s50
      %p61 = scmp.eq.s32.totalorder %s27, 0
      %p62 = por %p60, %p61
      %p63 = scmp.ne.s32.totalorder %s49, %s50
      %p64 = scmp.eq.s32.totalorder %s28, 1
      %p65 = por %p63, %p64
      %p67 = scmp.ne.s32.totalorder %s50, %s66
      %p68 = scmp.eq.s32.totalorder %s28, 0
      %p69 = por %p67, %p68
      %s70 = ssub.s32 %s29, %s41
      %p71 = scmp.eq.s32.totalorder %s70, 0
      %s73 = sadd.s32 %s72, 1
      %s74 = scalar_select %p71, %s72, %s73
      %p77 = pneg %p71
      %p78 = scmp.eq.s32.totalorder %s22, 1
      %p79 = por %p77, %p78
      %p80 = scmp.ne.s32.totalorder %s72, %s75
      %p81 = scmp.eq.s32.totalorder %s22, 0
      %p82 = por %p80, %p81
      %p83 = scmp.ne.s32.totalorder %s72, %s75
      %p84 = scmp.eq.s32.totalorder %s27, 1
      %p85 = por %p83, %p84
      %p86 = scmp.ne.s32.totalorder %s75, %s76
      %p87 = scmp.eq.s32.totalorder %s27, 0
      %p88 = por %p86, %p87
      %p89 = scmp.ne.s32.totalorder %s75, %s76
      %p90 = scmp.eq.s32.totalorder %s28, 1
      %p91 = por %p89, %p90
      %p93 = scmp.ne.s32.totalorder %s76, %s92
      %p94 = scmp.eq.s32.totalorder %s28, 0
      %p95 = por %p93, %p94
      %s96 = ssub.s32 %s29, %s41
      %p97 = scmp.eq.s32.totalorder %s96, 0
      %s99 = sadd.s32 %s98, 1
      %s100 = scalar_select %p97, %s98, %s99
      %p103 = pneg %p97
      %p104 = scmp.eq.s32.totalorder %s22, 1
      %p105 = por %p103, %p104
      %p106 = scmp.ne.s32.totalorder %s98, %s101
      %p107 = scmp.eq.s32.totalorder %s22, 0
      %p108 = por %p106, %p107
      %p109 = scmp.ne.s32.totalorder %s98, %s101
      %p110 = scmp.eq.s32.totalorder %s27, 1
      %p111 = por %p109, %p110
      %p112 = scmp.ne.s32.totalorder %s101, %s102
      %p113 = scmp.eq.s32.totalorder %s27, 0
      %p114 = por %p112, %p113
      %p115 = scmp.ne.s32.totalorder %s101, %s102
      %p116 = scmp.eq.s32.totalorder %s28, 1
      %p117 = por %p115, %p116
      %p119 = scmp.ne.s32.totalorder %s102, %s118
      %p120 = scmp.eq.s32.totalorder %s28, 0
      %p121 = por %p119, %p120
      %s122 = ssub.s32 %s29, %s41
      %s123 = ssub.s32 %s30, %s37
      %s124 = sor.u32 %s122, %s123
      %p125 = scmp.eq.s32.totalorder %s124, 0
      %s127 = sadd.s32 %s126, 1
      %s128 = scalar_select %p125, %s126, %s127
      %p131 = pneg %p125
      %p132 = scmp.eq.s32.totalorder %s22, 1
      %p133 = por %p131, %p132
      %p134 = scmp.ne.s32.totalorder %s126, %s129
      %p135 = scmp.eq.s32.totalorder %s22, 0
      %p136 = por %p134, %p135
      %p137 = scmp.ne.s32.totalorder %s126, %s129
      %p138 = scmp.eq.s32.totalorder %s27, 1
      %p139 = por %p137, %p138
      %p140 = scmp.ne.s32.totalorder %s129, %s130
      %p141 = scmp.eq.s32.totalorder %s27, 0
      %p142 = por %p140, %p141
      %p143 = scmp.ne.s32.totalorder %s129, %s130
      %p144 = scmp.eq.s32.totalorder %s28, 1
      %p145 = por %p143, %p144
      %p147 = scmp.ne.s32.totalorder %s130, %s146
      %p148 = scmp.eq.s32.totalorder %s28, 0
      %p149 = por %p147, %p148
      %s150 = ssub.s32 %s29, %s41
      %s151 = ssub.s32 %s30, %s37
      %s152 = sor.u32 %s150, %s151
      %p153 = scmp.eq.s32.totalorder %s152, 0
      %s155 = sadd.s32 %s154, 1
      %s156 = scalar_select %p153, %s154, %s155
      %p159 = pneg %p153
      %p160 = scmp.eq.s32.totalorder %s22, 1
      %p161 = por %p159, %p160
      %p162 = scmp.ne.s32.totalorder %s154, %s157
      %p163 = scmp.eq.s32.totalorder %s22, 0
      %p164 = por %p162, %p163
      %p165 = scmp.ne.s32.totalorder %s154, %s157
      %p166 = scmp.eq.s32.totalorder %s27, 1
      %p167 = por %p165, %p166
      %p168 = scmp.ne.s32.totalorder %s157, %s158
      %p169 = scmp.eq.s32.totalorder %s27, 0
      %p170 = por %p168, %p169
      %p171 = scmp.ne.s32.totalorder %s157, %s158
      %p172 = scmp.eq.s32.totalorder %s28, 1
      %p173 = por %p171, %p172
      %p175 = scmp.ne.s32.totalorder %s158, %s174
      %p176 = scmp.eq.s32.totalorder %s28, 0
      %p177 = por %p175, %p176
      %p178 = scmp.le.s32.totalorder 1, %s22
      %p179 = scmp.lt.s32.totalorder %s22, 3
      %p180 = pnand %p178, %p179
      %p181 = pneg %p180
      // Predicated region
      $region9: #{tpu_custom_call.1} parent=5 // pred_check
        _
      $region10: #{tpu_custom_call.1} parent=5 // pred_check_branch
        %183 = sbr.rel (%p180) target = $region12
      $region11: #{tpu_custom_call.1} parent=5 // pred_region
        %s184 = ssub.s32 %s22, 1
      $region12: #{tpu_custom_call.1} parent=5 // pred_fallthru
        _
      %p185 = scmp.lt.s32.totalorder %s22, 2
      // Predicated region
      $region13: #{tpu_custom_call.1} parent=5 // pred_check
        %p186 = pneg %p185
      $region14: #{tpu_custom_call.1} parent=5 // pred_check_branch
        %188 = sbr.rel (%p186) target = $region16
      $region15: #{tpu_custom_call.1} parent=5 // pred_region
        // Predicated region
        $region17: #{tpu_custom_call.1} parent=15 // pred_check
          %p189 = pneg %p56
        $region18: #{tpu_custom_call.1} parent=15 // pred_check_branch
          %191 = sbr.rel (%p189) target = $region20
        $region19: #{tpu_custom_call.1} parent=15 // pred_region
          %s192 = sand.u32 %s46, 1
          %s193 = scalar_lea.sflag [#allocation3], %s192
          %s194 = sand.u32 %s46, 1
          %s195 = smul.addr %s194, 128
          %s196 = scalar_lea.vmem [#allocation2], %s195
          %s197 = smul.u32 32, %s30
          %s199 = ssub.s32 2048, 2048
          %200 = vsyncadd %s193, %s199
          %s201 = smul.addr %s29, 32
          %s202 = sadd.s32 %s197, %s201
          %s203 = smul.addr %s202, 64
          %s204 = scalar_lea.hbm %s0, %s203
          %s205 = sshll.u32 %s196, 4
          %s206 = int_to_ptr.vmem [resolvable:$true] %s205
          %211 = dma.hbm_to_vmem [thread:$0]  %s204, 2048, %s206, %s193, 64, 64, 4
        $region20: #{tpu_custom_call.1} parent=15 // pred_fallthru
          _
        // Predicated region
        $region21: #{tpu_custom_call.1} parent=15 // pred_check
          %p212 = pneg %p82
        $region22: #{tpu_custom_call.1} parent=15 // pred_check_branch
          %214 = sbr.rel (%p212) target = $region24
        $region23: #{tpu_custom_call.1} parent=15 // pred_region
          %s215 = sand.u32 %s22, 1
          %s216 = scalar_lea.sflag [#allocation6], %s215
          %s217 = sand.u32 %s72, 1
          %s218 = smul.addr %s217, 128
          %s219 = scalar_lea.vmem [#allocation5], %s218
          %s221 = ssub.s32 2048, 2048
          %222 = vsyncadd %s216, %s221
          %s223 = smul.addr %s29, 32
          %s224 = smul.addr %s223, 64
          %s225 = scalar_lea.hbm %s1, %s224
          %s226 = sshll.u32 %s219, 4
          %s227 = int_to_ptr.vmem [resolvable:$true] %s226
          %232 = dma.hbm_to_vmem [thread:$0]  %s225, 2048, %s227, %s216, 128, 128, 8
        $region24: #{tpu_custom_call.1} parent=15 // pred_fallthru
          _
        // Predicated region
        $region25: #{tpu_custom_call.1} parent=15 // pred_check
          %p233 = pneg %p108
        $region26: #{tpu_custom_call.1} parent=15 // pred_check_branch
          %235 = sbr.rel (%p233) target = $region28
        $region27: #{tpu_custom_call.1} parent=15 // pred_region
          %s236 = sand.u32 %s22, 1
          %s237 = scalar_lea.sflag [#allocation6], %s236
          %s238 = sand.u32 %s98, 1
          %s239 = smul.addr %s238, 128
          %s240 = scalar_lea.vmem [#allocation7], %s239
          %s242 = ssub.s32 2048, 2048
          %243 = vsyncadd %s237, %s242
          %s244 = smul.addr %s29, 32
          %s245 = smul.addr %s244, 64
          %s246 = scalar_lea.hbm %s2, %s245
          %s247 = sshll.u32 %s240, 4
          %s248 = int_to_ptr.vmem [resolvable:$true] %s247
          %253 = dma.hbm_to_vmem [thread:$0]  %s246, 2048, %s248, %s237, 64, 64, 4
        $region28: #{tpu_custom_call.1} parent=15 // pred_fallthru
          _
        // Predicated region
        $region29: #{tpu_custom_call.1} parent=15 // pred_check
          %p254 = pneg %p136
        $region30: #{tpu_custom_call.1} parent=15 // pred_check_branch
          %256 = sbr.rel (%p254) target = $region32
        $region31: #{tpu_custom_call.1} parent=15 // pred_region
          %s257 = sand.u32 %s126, 1
          %s258 = scalar_lea.sflag [#allocation9], %s257
          %s259 = sand.u32 %s126, 1
          %s260 = smul.addr %s259, 256
          %s261 = scalar_lea.vmem [#allocation8], %s260
          %s262 = smul.u32 32, %s30
          %s264 = ssub.s32 4096, 4096
          %265 = vsyncadd %s258, %s264
          %s266 = smul.addr %s29, 32
          %s267 = sadd.s32 %s262, %s266
          %s268 = smul.addr %s267, 128
          %s269 = scalar_lea.hbm %s3, %s268
          %s270 = sshll.u32 %s261, 4
          %s271 = int_to_ptr.vmem [resolvable:$true] %s270
          %276 = dma.hbm_to_vmem [thread:$0]  %s269, 4096, %s271, %s258, 128, 128, 8
        $region32: #{tpu_custom_call.1} parent=15 // pred_fallthru
          _
      $region16: #{tpu_custom_call.1} parent=5 // pred_fallthru
        _
      %p277 = scmp.le.s32.totalorder 1, %s22
      %p278 = scmp.lt.s32.totalorder %s22, 3
      %p279 = pnand %p277, %p278
      %p280 = pneg %p279
      // Predicated region
      $region33: #{tpu_custom_call.1} parent=5 // pred_check
        _
      $region34: #{tpu_custom_call.1} parent=5 // pred_check_branch
        %282 = sbr.rel (%p279) target = $region36
      $region35: #{tpu_custom_call.1} parent=5 // pred_region
        %s283 = ssub.s32 %s22, 1
        %s284 = sand.u32 %s49, 1
        %s285 = scalar_lea.sflag [#allocation3], %s284
        %s286 = sand.u32 %s49, 1
        %s287 = smul.addr %s286, 128
        %s288 = scalar_lea.vmem [#allocation2], %s287
        // Predicated region
        $region37: #{tpu_custom_call.1} parent=35 // pred_check
          %p289 = pneg %p62
        $region38: #{tpu_custom_call.1} parent=35 // pred_check_branch
          %291 = sbr.rel (%p289) target = $region40
        $region39: #{tpu_custom_call.1} parent=35 // pred_region
          %292 = dma.done %s285, 2048
        $region40: #{tpu_custom_call.1} parent=35 // pred_fallthru
          _
        %s293 = sand.u32 %s27, 1
        %s294 = scalar_lea.sflag [#allocation6], %s293
        %s295 = sand.u32 %s75, 1
        %s296 = smul.addr %s295, 128
        %s297 = scalar_lea.vmem [#allocation5], %s296
        // Predicated region
        $region41: #{tpu_custom_call.1} parent=35 // pred_check
          %p298 = pneg %p88
        $region42: #{tpu_custom_call.1} parent=35 // pred_check_branch
          %300 = sbr.rel (%p298) target = $region44
        $region43: #{tpu_custom_call.1} parent=35 // pred_region
          %301 = dma.done %s294, 2048
        $region44: #{tpu_custom_call.1} parent=35 // pred_fallthru
          _
        %s302 = sand.u32 %s27, 1
        %s303 = scalar_lea.sflag [#allocation6], %s302
        %s304 = sand.u32 %s101, 1
        %s305 = smul.addr %s304, 128
        %s306 = scalar_lea.vmem [#allocation7], %s305
        // Predicated region
        $region45: #{tpu_custom_call.1} parent=35 // pred_check
          %p307 = pneg %p114
        $region46: #{tpu_custom_call.1} parent=35 // pred_check_branch
          %309 = sbr.rel (%p307) target = $region48
        $region47: #{tpu_custom_call.1} parent=35 // pred_region
          %310 = dma.done %s303, 2048
        $region48: #{tpu_custom_call.1} parent=35 // pred_fallthru
          _
        %s311 = sand.u32 %s129, 1
        %s312 = scalar_lea.sflag [#allocation9], %s311
        %s313 = sand.u32 %s129, 1
        %s314 = smul.addr %s313, 256
        %s315 = scalar_lea.vmem [#allocation8], %s314
        // Predicated region
        $region49: #{tpu_custom_call.1} parent=35 // pred_check
          %p316 = pneg %p142
        $region50: #{tpu_custom_call.1} parent=35 // pred_check_branch
          %318 = sbr.rel (%p316) target = $region52
        $region51: #{tpu_custom_call.1} parent=35 // pred_region
          %319 = dma.done %s312, 4096
        $region52: #{tpu_custom_call.1} parent=35 // pred_fallthru
          _
        %s320 = sand.u32 %s49, 1
        %s321 = scalar_lea.sflag [#allocation3], %s320
        %s322 = sand.u32 %s49, 1
        %s323 = smul.addr %s322, 128
        %s324 = scalar_lea.vmem [#allocation2], %s323
        %p325 = pneg %p62
        %p326 = pneg %p59
        %s327 = sand.u32 %s27, 1
        %s328 = scalar_lea.sflag [#allocation6], %s327
        %s329 = sand.u32 %s75, 1
        %s330 = smul.addr %s329, 128
        %s331 = scalar_lea.vmem [#allocation5], %s330
        %p332 = pneg %p88
        %p333 = pneg %p85
        %s334 = sand.u32 %s27, 1
        %s335 = scalar_lea.sflag [#allocation6], %s334
        %s336 = sand.u32 %s101, 1
        %s337 = smul.addr %s336, 128
        %s338 = scalar_lea.vmem [#allocation7], %s337
        %p339 = pneg %p114
        %p340 = pneg %p111
        %s341 = sand.u32 %s129, 1
        %s342 = scalar_lea.sflag [#allocation9], %s341
        %s343 = sand.u32 %s129, 1
        %s344 = smul.addr %s343, 256
        %s345 = scalar_lea.vmem [#allocation8], %s344
        %p346 = pneg %p142
        %p347 = pneg %p139
        %p348 = pneg %p170
        %p349 = pneg %p167
        %s350 = sand.u32 %s157, 1
        %s351 = scalar_lea.sflag [#allocation4], %s350
        %s352 = sand.u32 %s157, 1
        %s353 = smul.addr %s352, 256
        %s354 = scalar_lea.vmem [#allocation10], %s353
        %s355 = smul.u32 32, %s32
        %s356 = smul.u32 32, %s32
        %s357 = smul.u32 32, %s32
        %v359 = vld [vmem:[%s288] sm:$0xf]
        %v360 = vld [vmem:[%s288 + $0x4] sm:$0xf]
        %v361 = vld [vmem:[%s288 + $0x8] sm:$0xf]
        %v362 = vld [vmem:[%s288 + $0xc] sm:$0xf]
        %v363 = vld [vmem:[%s288 + $0x10] sm:$0xf]
        %v364 = vld [vmem:[%s288 + $0x14] sm:$0xf]
        %v365 = vld [vmem:[%s288 + $0x18] sm:$0xf]
        %v366 = vld [vmem:[%s288 + $0x1c] sm:$0xf]
        %v367 = vld [vmem:[%s288 + $0x20] sm:$0xf]
        %v368 = vld [vmem:[%s288 + $0x24] sm:$0xf]
        %v369 = vld [vmem:[%s288 + $0x28] sm:$0xf]
        %v370 = vld [vmem:[%s288 + $0x2c] sm:$0xf]
        %v371 = vld [vmem:[%s288 + $0x30] sm:$0xf]
        %v372 = vld [vmem:[%s288 + $0x34] sm:$0xf]
        %v373 = vld [vmem:[%s288 + $0x38] sm:$0xf]
        %v374 = vld [vmem:[%s288 + $0x3c] sm:$0xf]
        %v375 = vld [vmem:[%s288 + $0x40] sm:$0xf]
        %v376 = vld [vmem:[%s288 + $0x44] sm:$0xf]
        %v377 = vld [vmem:[%s288 + $0x48] sm:$0xf]
        %v378 = vld [vmem:[%s288 + $0x4c] sm:$0xf]
        %v379 = vld [vmem:[%s288 + $0x50] sm:$0xf]
        %v380 = vld [vmem:[%s288 + $0x54] sm:$0xf]
        %v381 = vld [vmem:[%s288 + $0x58] sm:$0xf]
        %v382 = vld [vmem:[%s288 + $0x5c] sm:$0xf]
        %v383 = vld [vmem:[%s288 + $0x60] sm:$0xf]
        %v384 = vld [vmem:[%s288 + $0x64] sm:$0xf]
        %v385 = vld [vmem:[%s288 + $0x68] sm:$0xf]
        %v386 = vld [vmem:[%s288 + $0x6c] sm:$0xf]
        %v387 = vld [vmem:[%s288 + $0x70] sm:$0xf]
        %v388 = vld [vmem:[%s288 + $0x74] sm:$0xf]
        %v389 = vld [vmem:[%s288 + $0x78] sm:$0xf]
        %v390 = vld [vmem:[%s288 + $0x7c] sm:$0xf]
        %v391 = vld [vmem:[%s297] sm:$0xff]
        %v392 = vld [vmem:[%s297 + $0x8] sm:$0xff]
        %v393 = vld [vmem:[%s297 + $0x10] sm:$0xff]
        %v394 = vld [vmem:[%s297 + $0x18] sm:$0xff]
        %v395 = vld [vmem:[%s297 + $0x20] sm:$0xff]
        %v396 = vld [vmem:[%s297 + $0x28] sm:$0xff]
        %v397 = vld [vmem:[%s297 + $0x30] sm:$0xff]
        %v398 = vld [vmem:[%s297 + $0x38] sm:$0xff]
        %v399 = vld [vmem:[%s297 + $0x40] sm:$0xff]
        %v400 = vld [vmem:[%s297 + $0x48] sm:$0xff]
        %v401 = vld [vmem:[%s297 + $0x50] sm:$0xff]
        %v402 = vld [vmem:[%s297 + $0x58] sm:$0xff]
        %v403 = vld [vmem:[%s297 + $0x60] sm:$0xff]
        %v404 = vld [vmem:[%s297 + $0x68] sm:$0xff]
        %v405 = vld [vmem:[%s297 + $0x70] sm:$0xff]
        %v406 = vld [vmem:[%s297 + $0x78] sm:$0xff]
        %v407 = vld [vmem:[%s306] sm:$0xf]
        %v408 = vld [vmem:[%s306 + $0x4] sm:$0xf]
        %v409 = vld [vmem:[%s306 + $0x8] sm:$0xf]
        %v410 = vld [vmem:[%s306 + $0xc] sm:$0xf]
        %v411 = vld [vmem:[%s306 + $0x10] sm:$0xf]
        %v412 = vld [vmem:[%s306 + $0x14] sm:$0xf]
        %v413 = vld [vmem:[%s306 + $0x18] sm:$0xf]
        %v414 = vld [vmem:[%s306 + $0x1c] sm:$0xf]
        %v415 = vld [vmem:[%s306 + $0x20] sm:$0xf]
        %v416 = vld [vmem:[%s306 + $0x24] sm:$0xf]
        %v417 = vld [vmem:[%s306 + $0x28] sm:$0xf]
        %v418 = vld [vmem:[%s306 + $0x2c] sm:$0xf]
        %v419 = vld [vmem:[%s306 + $0x30] sm:$0xf]
        %v420 = vld [vmem:[%s306 + $0x34] sm:$0xf]
        %v421 = vld [vmem:[%s306 + $0x38] sm:$0xf]
        %v422 = vld [vmem:[%s306 + $0x3c] sm:$0xf]
        %v423 = vld [vmem:[%s306 + $0x40] sm:$0xf]
        %v424 = vld [vmem:[%s306 + $0x44] sm:$0xf]
        %v425 = vld [vmem:[%s306 + $0x48] sm:$0xf]
        %v426 = vld [vmem:[%s306 + $0x4c] sm:$0xf]
        %v427 = vld [vmem:[%s306 + $0x50] sm:$0xf]
        %v428 = vld [vmem:[%s306 + $0x54] sm:$0xf]
        %v429 = vld [vmem:[%s306 + $0x58] sm:$0xf]
        %v430 = vld [vmem:[%s306 + $0x5c] sm:$0xf]
        %v431 = vld [vmem:[%s306 + $0x60] sm:$0xf]
        %v432 = vld [vmem:[%s306 + $0x64] sm:$0xf]
        %v433 = vld [vmem:[%s306 + $0x68] sm:$0xf]
        %v434 = vld [vmem:[%s306 + $0x6c] sm:$0xf]
        %v435 = vld [vmem:[%s306 + $0x70] sm:$0xf]
        %v436 = vld [vmem:[%s306 + $0x74] sm:$0xf]
        %v437 = vld [vmem:[%s306 + $0x78] sm:$0xf]
        %v438 = vld [vmem:[%s306 + $0x7c] sm:$0xf]
        %v439 = vlaneseq
        %v440 = vand.u32 %v439, 127
        %v441 = vadd.s32 %v440, 128
        %v474 = vunpack.c.l.b16 %v359
        %v475 = vunpack.c.l.b16 %v360
        %v476 = vunpack.c.l.b16 %v361
        %v477 = vunpack.c.l.b16 %v362
        %v478 = vunpack.c.l.b16 %v363
        %v479 = vunpack.c.l.b16 %v364
        %v480 = vunpack.c.l.b16 %v365
        %v481 = vunpack.c.l.b16 %v366
        %v482 = vunpack.c.l.b16 %v367
        %v483 = vunpack.c.l.b16 %v368
        %v484 = vunpack.c.l.b16 %v369
        %v485 = vunpack.c.l.b16 %v370
        %v486 = vunpack.c.l.b16 %v371
        %v487 = vunpack.c.l.b16 %v372
        %v488 = vunpack.c.l.b16 %v373
        %v489 = vunpack.c.l.b16 %v374
        %v490 = vunpack.c.l.b16 %v375
        %v491 = vunpack.c.l.b16 %v376
        %v492 = vunpack.c.l.b16 %v377
        %v493 = vunpack.c.l.b16 %v378
        %v494 = vunpack.c.l.b16 %v379
        %v495 = vunpack.c.l.b16 %v380
        %v496 = vunpack.c.l.b16 %v381
        %v497 = vunpack.c.l.b16 %v382
        %v498 = vunpack.c.l.b16 %v383
        %v499 = vunpack.c.l.b16 %v384
        %v500 = vunpack.c.l.b16 %v385
        %v501 = vunpack.c.l.b16 %v386
        %v502 = vunpack.c.l.b16 %v387
        %v503 = vunpack.c.l.b16 %v388
        %v504 = vunpack.c.l.b16 %v389
        %v505 = vunpack.c.l.b16 %v390
        %v506 = vpack.c.b16 %v475, %v474
        %v507 = vpack.c.b16 %v477, %v476
        %v508 = vpack.c.b16 %v479, %v478
        %v509 = vpack.c.b16 %v481, %v480
        %v510 = vpack.c.b16 %v483, %v482
        %v511 = vpack.c.b16 %v485, %v484
        %v512 = vpack.c.b16 %v487, %v486
        %v513 = vpack.c.b16 %v489, %v488
        %v514 = vpack.c.b16 %v491, %v490
        %v515 = vpack.c.b16 %v493, %v492
        %v516 = vpack.c.b16 %v495, %v494
        %v517 = vpack.c.b16 %v497, %v496
        %v518 = vpack.c.b16 %v499, %v498
        %v519 = vpack.c.b16 %v501, %v500
        %v520 = vpack.c.b16 %v503, %v502
        %v521 = vpack.c.b16 %v505, %v504
        %v554 = vunpack.c.l.b16 %v391
        %v555 = vunpack.c.h.b16 %v391
        %v556 = vunpack.c.l.b16 %v392
        %v557 = vunpack.c.h.b16 %v392
        %v558 = vunpack.c.l.b16 %v393
        %v559 = vunpack.c.h.b16 %v393
        %v560 = vunpack.c.l.b16 %v394
        %v561 = vunpack.c.h.b16 %v394
        %v562 = vunpack.c.l.b16 %v395
        %v563 = vunpack.c.h.b16 %v395
        %v564 = vunpack.c.l.b16 %v396
        %v565 = vunpack.c.h.b16 %v396
        %v566 = vunpack.c.l.b16 %v397
        %v567 = vunpack.c.h.b16 %v397
        %v568 = vunpack.c.l.b16 %v398
        %v569 = vunpack.c.h.b16 %v398
        %v570 = vunpack.c.l.b16 %v399
        %v571 = vunpack.c.h.b16 %v399
        %v572 = vunpack.c.l.b16 %v400
        %v573 = vunpack.c.h.b16 %v400
        %v574 = vunpack.c.l.b16 %v401
        %v575 = vunpack.c.h.b16 %v401
        %v576 = vunpack.c.l.b16 %v402
        %v577 = vunpack.c.h.b16 %v402
        %v578 = vunpack.c.l.b16 %v403
        %v579 = vunpack.c.h.b16 %v403
        %v580 = vunpack.c.l.b16 %v404
        %v581 = vunpack.c.h.b16 %v404
        %v582 = vunpack.c.l.b16 %v405
        %v583 = vunpack.c.h.b16 %v405
        %v584 = vunpack.c.l.b16 %v406
        %v585 = vunpack.c.h.b16 %v406
        %v586 = vpack.c.b16 %v556, %v554
        %v587 = vpack.c.b16 %v557, %v555
        %v588 = vpack.c.b16 %v560, %v558
        %v589 = vpack.c.b16 %v561, %v559
        %v590 = vpack.c.b16 %v564, %v562
        %v591 = vpack.c.b16 %v565, %v563
        %v592 = vpack.c.b16 %v568, %v566
        %v593 = vpack.c.b16 %v569, %v567
        %v594 = vpack.c.b16 %v572, %v570
        %v595 = vpack.c.b16 %v573, %v571
        %v596 = vpack.c.b16 %v576, %v574
        %v597 = vpack.c.b16 %v577, %v575
        %v598 = vpack.c.b16 %v580, %v578
        %v599 = vpack.c.b16 %v581, %v579
        %v600 = vpack.c.b16 %v584, %v582
        %v601 = vpack.c.b16 %v585, %v583
        %618 = vmatprep.subr.bf16.mxu0 %v587
        %619 = vmatpush1.bf16.msra.mxu0 %v586
        %620 = vmatprep.subr.bf16.mxu0 %v589
        %621 = vmatpush1.bf16.msra.mxu0 %v588
        %622 = vmatprep.subr.bf16.mxu0 %v591
        %623 = vmatpush1.bf16.msra.mxu0 %v590
        %624 = vmatprep.subr.bf16.mxu0 %v593
        %625 = vmatpush1.bf16.msra.mxu0 %v592
        %626 = vmatprep.subr.bf16.mxu0 %v595
        %627 = vmatpush1.bf16.msra.mxu0 %v594
        %628 = vmatprep.subr.bf16.mxu0 %v597
        %629 = vmatpush1.bf16.msra.mxu0 %v596
        %630 = vmatprep.subr.bf16.mxu0 %v599
        %631 = vmatpush1.bf16.msra.mxu0 %v598
        %632 = vmatprep.subr.bf16.mxu0 %v601
        %633 = vmatpush1.bf16.msra.mxu0 %v600
        %634 = vmatprep.subr.bf16.mxu0 0
        %635 = vmatpush1.bf16.msra.mxu0 0
        %636 = vmatprep.subr.bf16.mxu0 0
        %637 = vmatpush1.bf16.msra.mxu0 0
        %638 = vmatprep.subr.bf16.mxu0 0
        %639 = vmatpush1.bf16.msra.mxu0 0
        %640 = vmatprep.subr.bf16.mxu0 0
        %641 = vmatpush1.bf16.msra.mxu0 0
        %642 = vmatprep.subr.bf16.mxu0 0
        %643 = vmatpush1.bf16.msra.mxu0 0
        %644 = vmatprep.subr.bf16.mxu0 0
        %645 = vmatpush1.bf16.msra.mxu0 0
        %646 = vmatprep.subr.bf16.mxu0 0
        %647 = vmatpush1.bf16.msra.mxu0 0
        %648 = vmatprep.subr.bf16.mxu0 0
        %649 = vmatpush1.bf16.msra.mxu0 0
        %650 = vmatprep.mubr.bf16.mxu0 0
        %651 = vmatmul.mubr.bf16.gmra.mrb[0].mxu0 %v506
        %v652 = vpop.f32.mrb[0].mxu0
        %v653 = vadd.f32 1.5, %v652
        %v654 = vpop.f32.mrb[0].mxu0
        %v655 = vadd.f32 1.5, %v654
        %v656 = vpop.f32.mrb[0].mxu0
        %v657 = vadd.f32 1.5, %v656
        %v658 = vpop.f32.mrb[0].mxu0
        %v659 = vadd.f32 1.5, %v658
        %660 = vmatprep.mubr.bf16.mxu0 0
        %661 = vmatmul.mubr.bf16.gmra.mrb[0].mxu0 %v507
        %v662 = vpop.f32.mrb[0].mxu0
        %v663 = vadd.f32 1.5, %v662
        %v664 = vpop.f32.mrb[0].mxu0
        %v665 = vadd.f32 1.5, %v664
        %v666 = vpop.f32.mrb[0].mxu0
        %v667 = vadd.f32 1.5, %v666
        %v668 = vpop.f32.mrb[0].mxu0
        %v669 = vadd.f32 1.5, %v668
        %670 = vmatprep.mubr.bf16.mxu0 0
        %671 = vmatmul.mubr.bf16.gmra.mrb[0].mxu0 %v508
        %v672 = vpop.f32.mrb[0].mxu0
        %v673 = vadd.f32 1.5, %v672
        %v674 = vpop.f32.mrb[0].mxu0
        %v675 = vadd.f32 1.5, %v674
        %v676 = vpop.f32.mrb[0].mxu0
        %v677 = vadd.f32 1.5, %v676
        %v678 = vpop.f32.mrb[0].mxu0
        %v679 = vadd.f32 1.5, %v678
        %680 = vmatprep.mubr.bf16.mxu0 0
        %681 = vmatmul.mubr.bf16.gmra.mrb[0].mxu0 %v509
        %v682 = vpop.f32.mrb[0].mxu0
        %v683 = vadd.f32 1.5, %v682
        %v684 = vpop.f32.mrb[0].mxu0
        %v685 = vadd.f32 1.5, %v684
        %v686 = vpop.f32.mrb[0].mxu0
        %v687 = vadd.f32 1.5, %v686
        %v688 = vpop.f32.mrb[0].mxu0
        %v689 = vadd.f32 1.5, %v688
        %690 = vmatprep.mubr.bf16.mxu0 0
        %691 = vmatmul.mubr.bf16.gmra.mrb[0].mxu0 %v510
        %v692 = vpop.f32.mrb[0].mxu0
        %v693 = vadd.f32 1.5, %v692
        %v694 = vpop.f32.mrb[0].mxu0
        %v695 = vadd.f32 1.5, %v694
        %v696 = vpop.f32.mrb[0].mxu0
        %v697 = vadd.f32 1.5, %v696
        %v698 = vpop.f32.mrb[0].mxu0
        %v699 = vadd.f32 1.5, %v698
        %700 = vmatprep.mubr.bf16.mxu0 0
        %701 = vmatmul.mubr.bf16.gmra.mrb[0].mxu0 %v511
        %v702 = vpop.f32.mrb[0].mxu0
        %v703 = vadd.f32 1.5, %v702
        %v704 = vpop.f32.mrb[0].mxu0
        %v705 = vadd.f32 1.5, %v704
        %v706 = vpop.f32.mrb[0].mxu0
        %v707 = vadd.f32 1.5, %v706
        %v708 = vpop.f32.mrb[0].mxu0
        %v709 = vadd.f32 1.5, %v708
        %710 = vmatprep.mubr.bf16.mxu0 0
        %711 = vmatmul.mubr.bf16.gmra.mrb[0].mxu0 %v512
        %v712 = vpop.f32.mrb[0].mxu0
        %v713 = vadd.f32 1.5, %v712
        %v714 = vpop.f32.mrb[0].mxu0
        %v715 = vadd.f32 1.5, %v714
        %v716 = vpop.f32.mrb[0].mxu0
        %v717 = vadd.f32 1.5, %v716
        %v718 = vpop.f32.mrb[0].mxu0
        %v719 = vadd.f32 1.5, %v718
        %720 = vmatprep.mubr.bf16.mxu0 0
        %721 = vmatmul.mubr.bf16.gmra.mrb[0].mxu0 %v513
        %v722 = vpop.f32.mrb[0].mxu0
        %v723 = vadd.f32 1.5, %v722
        %v724 = vpop.f32.mrb[0].mxu0
        %v725 = vadd.f32 1.5, %v724
        %v726 = vpop.f32.mrb[0].mxu0
        %v727 = vadd.f32 1.5, %v726
        %v728 = vpop.f32.mrb[0].mxu0
        %v729 = vadd.f32 1.5, %v728
        %730 = vmatprep.mubr.bf16.mxu0 0
        %731 = vmatmul.mubr.bf16.gmra.mrb[0].mxu0 %v514
        %v732 = vpop.f32.mrb[0].mxu0
        %v733 = vadd.f32 1.5, %v732
        %v734 = vpop.f32.mrb[0].mxu0
        %v735 = vadd.f32 1.5, %v734
        %v736 = vpop.f32.mrb[0].mxu0
        %v737 = vadd.f32 1.5, %v736
        %v738 = vpop.f32.mrb[0].mxu0
        %v739 = vadd.f32 1.5, %v738
        %740 = vmatprep.mubr.bf16.mxu0 0
        %741 = vmatmul.mubr.bf16.gmra.mrb[0].mxu0 %v515
        %v742 = vpop.f32.mrb[0].mxu0
        %v743 = vadd.f32 1.5, %v742
        %v744 = vpop.f32.mrb[0].mxu0
        %v745 = vadd.f32 1.5, %v744
        %v746 = vpop.f32.mrb[0].mxu0
        %v747 = vadd.f32 1.5, %v746
        %v748 = vpop.f32.mrb[0].mxu0
        %v749 = vadd.f32 1.5, %v748
        %750 = vmatprep.mubr.bf16.mxu0 0
        %751 = vmatmul.mubr.bf16.gmra.mrb[0].mxu0 %v516
        %v752 = vpop.f32.mrb[0].mxu0
        %v753 = vadd.f32 1.5, %v752
        %v754 = vpop.f32.mrb[0].mxu0
        %v755 = vadd.f32 1.5, %v754
        %v756 = vpop.f32.mrb[0].mxu0
        %v757 = vadd.f32 1.5, %v756
        %v758 = vpop.f32.mrb[0].mxu0
        %v759 = vadd.f32 1.5, %v758
        %760 = vmatprep.mubr.bf16.mxu0 0
        %761 = vmatmul.mubr.bf16.gmra.mrb[0].mxu0 %v517
        %v762 = vpop.f32.mrb[0].mxu0
        %v763 = vadd.f32 1.5, %v762
        %v764 = vpop.f32.mrb[0].mxu0
        %v765 = vadd.f32 1.5, %v764
        %v766 = vpop.f32.mrb[0].mxu0
        %v767 = vadd.f32 1.5, %v766
        %v768 = vpop.f32.mrb[0].mxu0
        %v769 = vadd.f32 1.5, %v768
        %770 = vmatprep.mubr.bf16.mxu0 0
        %771 = vmatmul.mubr.bf16.gmra.mrb[0].mxu0 %v518
        %v772 = vpop.f32.mrb[0].mxu0
        %v773 = vadd.f32 1.5, %v772
        %v774 = vpop.f32.mrb[0].mxu0
        %v775 = vadd.f32 1.5, %v774
        %v776 = vpop.f32.mrb[0].mxu0
        %v777 = vadd.f32 1.5, %v776
        %v778 = vpop.f32.mrb[0].mxu0
        %v779 = vadd.f32 1.5, %v778
        %780 = vmatprep.mubr.bf16.mxu0 0
        %781 = vmatmul.mubr.bf16.gmra.mrb[0].mxu0 %v519
        %v782 = vpop.f32.mrb[0].mxu0
        %v783 = vadd.f32 1.5, %v782
        %v784 = vpop.f32.mrb[0].mxu0
        %v785 = vadd.f32 1.5, %v784
        %v786 = vpop.f32.mrb[0].mxu0
        %v787 = vadd.f32 1.5, %v786
        %v788 = vpop.f32.mrb[0].mxu0
        %v789 = vadd.f32 1.5, %v788
        %790 = vmatprep.mubr.bf16.mxu0 0
        %791 = vmatmul.mubr.bf16.gmra.mrb[0].mxu0 %v520
        %v792 = vpop.f32.mrb[0].mxu0
        %v793 = vadd.f32 1.5, %v792
        %v794 = vpop.f32.mrb[0].mxu0
        %v795 = vadd.f32 1.5, %v794
        %v796 = vpop.f32.mrb[0].mxu0
        %v797 = vadd.f32 1.5, %v796
        %v798 = vpop.f32.mrb[0].mxu0
        %v799 = vadd.f32 1.5, %v798
        %800 = vmatprep.mubr.bf16.mxu0 0
        %801 = vmatmul.mubr.bf16.gmra.mrb[0].mxu0 %v521
        %v802 = vpop.f32.mrb[0].mxu0
        %v803 = vadd.f32 1.5, %v802
        %v804 = vpop.f32.mrb[0].mxu0
        %v805 = vadd.f32 1.5, %v804
        %v806 = vpop.f32.mrb[0].mxu0
        %v807 = vadd.f32 1.5, %v806
        %v808 = vpop.f32.mrb[0].mxu0
        %v809 = vadd.f32 1.5, %v808
        %810 = vdwg.mxu0
        %v811 = vmul.f32 %v653, 2097152.0
        %v812 = vmul.f32 %v655, 2097152.0
        %v813 = vmul.f32 %v657, 2097152.0
        %v814 = vmul.f32 %v659, 2097152.0
        %v815 = vmul.f32 %v663, 2097152.0
        %v816 = vmul.f32 %v665, 2097152.0
        %v817 = vmul.f32 %v667, 2097152.0
        %v818 = vmul.f32 %v669, 2097152.0
        %v819 = vmul.f32 %v673, 2097152.0
        %v820 = vmul.f32 %v675, 2097152.0
        %v821 = vmul.f32 %v677, 2097152.0
        %v822 = vmul.f32 %v679, 2097152.0
        %v823 = vmul.f32 %v683, 2097152.0
        %v824 = vmul.f32 %v685, 2097152.0
        %v825 = vmul.f32 %v687, 2097152.0
        %v826 = vmul.f32 %v689, 2097152.0
        %v827 = vmul.f32 %v693, 2097152.0
        %v828 = vmul.f32 %v695, 2097152.0
        %v829 = vmul.f32 %v697, 2097152.0
        %v830 = vmul.f32 %v699, 2097152.0
        %v831 = vmul.f32 %v703, 2097152.0
        %v832 = vmul.f32 %v705, 2097152.0
        %v833 = vmul.f32 %v707, 2097152.0
        %v834 = vmul.f32 %v709, 2097152.0
        %v835 = vmul.f32 %v713, 2097152.0
        %v836 = vmul.f32 %v715, 2097152.0
        %v837 = vmul.f32 %v717, 2097152.0
        %v838 = vmul.f32 %v719, 2097152.0
        %v839 = vmul.f32 %v723, 2097152.0
        %v840 = vmul.f32 %v725, 2097152.0
        %v841 = vmul.f32 %v727, 2097152.0
        %v842 = vmul.f32 %v729, 2097152.0
        %v843 = vmul.f32 %v733, 2097152.0
        %v844 = vmul.f32 %v735, 2097152.0
        %v845 = vmul.f32 %v737, 2097152.0
        %v846 = vmul.f32 %v739, 2097152.0
        %v847 = vmul.f32 %v743, 2097152.0
        %v848 = vmul.f32 %v745, 2097152.0
        %v849 = vmul.f32 %v747, 2097152.0
        %v850 = vmul.f32 %v749, 2097152.0
        %v851 = vmul.f32 %v753, 2097152.0
        %v852 = vmul.f32 %v755, 2097152.0
        %v853 = vmul.f32 %v757, 2097152.0
        %v854 = vmul.f32 %v759, 2097152.0
        %v855 = vmul.f32 %v763, 2097152.0
        %v856 = vmul.f32 %v765, 2097152.0
        %v857 = vmul.f32 %v767, 2097152.0
        %v858 = vmul.f32 %v769, 2097152.0
        %v859 = vmul.f32 %v773, 2097152.0
        %v860 = vmul.f32 %v775, 2097152.0
        %v861 = vmul.f32 %v777, 2097152.0
        %v862 = vmul.f32 %v779, 2097152.0
        %v863 = vmul.f32 %v783, 2097152.0
        %v864 = vmul.f32 %v785, 2097152.0
        %v865 = vmul.f32 %v787, 2097152.0
        %v866 = vmul.f32 %v789, 2097152.0
        %v867 = vmul.f32 %v793, 2097152.0
        %v868 = vmul.f32 %v795, 2097152.0
        %v869 = vmul.f32 %v797, 2097152.0
        %v870 = vmul.f32 %v799, 2097152.0
        %v871 = vmul.f32 %v803, 2097152.0
        %v872 = vmul.f32 %v805, 2097152.0
        %v873 = vmul.f32 %v807, 2097152.0
        %v874 = vmul.f32 %v809, 2097152.0
        %v875 = vcvt.f32.s32.to.zero.pseudo %v811
        %v876 = vcvt.f32.s32.to.zero.pseudo %v812
        %v877 = vcvt.f32.s32.to.zero.pseudo %v813
        %v878 = vcvt.f32.s32.to.zero.pseudo %v814
        %v879 = vcvt.f32.s32.to.zero.pseudo %v815
        %v880 = vcvt.f32.s32.to.zero.pseudo %v816
        %v881 = vcvt.f32.s32.to.zero.pseudo %v817
        %v882 = vcvt.f32.s32.to.zero.pseudo %v818
        %v883 = vcvt.f32.s32.to.zero.pseudo %v819
        %v884 = vcvt.f32.s32.to.zero.pseudo %v820
        %v885 = vcvt.f32.s32.to.zero.pseudo %v821
        %v886 = vcvt.f32.s32.to.zero.pseudo %v822
        %v887 = vcvt.f32.s32.to.zero.pseudo %v823
        %v888 = vcvt.f32.s32.to.zero.pseudo %v824
        %v889 = vcvt.f32.s32.to.zero.pseudo %v825
        %v890 = vcvt.f32.s32.to.zero.pseudo %v826
        %v891 = vcvt.f32.s32.to.zero.pseudo %v827
        %v892 = vcvt.f32.s32.to.zero.pseudo %v828
        %v893 = vcvt.f32.s32.to.zero.pseudo %v829
        %v894 = vcvt.f32.s32.to.zero.pseudo %v830
        %v895 = vcvt.f32.s32.to.zero.pseudo %v831
        %v896 = vcvt.f32.s32.to.zero.pseudo %v832
        %v897 = vcvt.f32.s32.to.zero.pseudo %v833
        %v898 = vcvt.f32.s32.to.zero.pseudo %v834
        %v899 = vcvt.f32.s32.to.zero.pseudo %v835
        %v900 = vcvt.f32.s32.to.zero.pseudo %v836
        %v901 = vcvt.f32.s32.to.zero.pseudo %v837
        %v902 = vcvt.f32.s32.to.zero.pseudo %v838
        %v903 = vcvt.f32.s32.to.zero.pseudo %v839
        %v904 = vcvt.f32.s32.to.zero.pseudo %v840
        %v905 = vcvt.f32.s32.to.zero.pseudo %v841
        %v906 = vcvt.f32.s32.to.zero.pseudo %v842
        %v907 = vcvt.f32.s32.to.zero.pseudo %v843
        %v908 = vcvt.f32.s32.to.zero.pseudo %v844
        %v909 = vcvt.f32.s32.to.zero.pseudo %v845
        %v910 = vcvt.f32.s32.to.zero.pseudo %v846
        %v911 = vcvt.f32.s32.to.zero.pseudo %v847
        %v912 = vcvt.f32.s32.to.zero.pseudo %v848
        %v913 = vcvt.f32.s32.to.zero.pseudo %v849
        %v914 = vcvt.f32.s32.to.zero.pseudo %v850
        %v915 = vcvt.f32.s32.to.zero.pseudo %v851
        %v916 = vcvt.f32.s32.to.zero.pseudo %v852
        %v917 = vcvt.f32.s32.to.zero.pseudo %v853
        %v918 = vcvt.f32.s32.to.zero.pseudo %v854
        %v919 = vcvt.f32.s32.to.zero.pseudo %v855
        %v920 = vcvt.f32.s32.to.zero.pseudo %v856
        %v921 = vcvt.f32.s32.to.zero.pseudo %v857
        %v922 = vcvt.f32.s32.to.zero.pseudo %v858
        %v923 = vcvt.f32.s32.to.zero.pseudo %v859
        %v924 = vcvt.f32.s32.to.zero.pseudo %v860
        %v925 = vcvt.f32.s32.to.zero.pseudo %v861
        %v926 = vcvt.f32.s32.to.zero.pseudo %v862
        %v927 = vcvt.f32.s32.to.zero.pseudo %v863
        %v928 = vcvt.f32.s32.to.zero.pseudo %v864
        %v929 = vcvt.f32.s32.to.zero.pseudo %v865
        %v930 = vcvt.f32.s32.to.zero.pseudo %v866
        %v931 = vcvt.f32.s32.to.zero.pseudo %v867
        %v932 = vcvt.f32.s32.to.zero.pseudo %v868
        %v933 = vcvt.f32.s32.to.zero.pseudo %v869
        %v934 = vcvt.f32.s32.to.zero.pseudo %v870
        %v935 = vcvt.f32.s32.to.zero.pseudo %v871
        %v936 = vcvt.f32.s32.to.zero.pseudo %v872
        %v937 = vcvt.f32.s32.to.zero.pseudo %v873
        %v938 = vcvt.f32.s32.to.zero.pseudo %v874
        %v939 = vmul.u32 %v875, 256
        %v940 = vmul.u32 %v876, 256
        %v941 = vmul.u32 %v877, 256
        %v942 = vmul.u32 %v878, 256
        %v943 = vmul.u32 %v879, 256
        %v944 = vmul.u32 %v880, 256
        %v945 = vmul.u32 %v881, 256
        %v946 = vmul.u32 %v882, 256
        %v947 = vmul.u32 %v883, 256
        %v948 = vmul.u32 %v884, 256
        %v949 = vmul.u32 %v885, 256
        %v950 = vmul.u32 %v886, 256
        %v951 = vmul.u32 %v887, 256
        %v952 = vmul.u32 %v888, 256
        %v953 = vmul.u32 %v889, 256
        %v954 = vmul.u32 %v890, 256
        %v955 = vmul.u32 %v891, 256
        %v956 = vmul.u32 %v892, 256
        %v957 = vmul.u32 %v893, 256
        %v958 = vmul.u32 %v894, 256
        %v959 = vmul.u32 %v895, 256
        %v960 = vmul.u32 %v896, 256
        %v961 = vmul.u32 %v897, 256
        %v962 = vmul.u32 %v898, 256
        %v963 = vmul.u32 %v899, 256
        %v964 = vmul.u32 %v900, 256
        %v965 = vmul.u32 %v901, 256
        %v966 = vmul.u32 %v902, 256
        %v967 = vmul.u32 %v903, 256
        %v968 = vmul.u32 %v904, 256
        %v969 = vmul.u32 %v905, 256
        %v970 = vmul.u32 %v906, 256
        %v971 = vmul.u32 %v907, 256
        %v972 = vmul.u32 %v908, 256
        %v973 = vmul.u32 %v909, 256
        %v974 = vmul.u32 %v910, 256
        %v975 = vmul.u32 %v911, 256
        %v976 = vmul.u32 %v912, 256
        %v977 = vmul.u32 %v913, 256
        %v978 = vmul.u32 %v914, 256
        %v979 = vmul.u32 %v915, 256
        %v980 = vmul.u32 %v916, 256
        %v981 = vmul.u32 %v917, 256
        %v982 = vmul.u32 %v918, 256
        %v983 = vmul.u32 %v919, 256
        %v984 = vmul.u32 %v920, 256
        %v985 = vmul.u32 %v921, 256
        %v986 = vmul.u32 %v922, 256
        %v987 = vmul.u32 %v923, 256
        %v988 = vmul.u32 %v924, 256
        %v989 = vmul.u32 %v925, 256
        %v990 = vmul.u32 %v926, 256
        %v991 = vmul.u32 %v927, 256
        %v992 = vmul.u32 %v928, 256
        %v993 = vmul.u32 %v929, 256
        %v994 = vmul.u32 %v930, 256
        %v995 = vmul.u32 %v931, 256
        %v996 = vmul.u32 %v932, 256
        %v997 = vmul.u32 %v933, 256
        %v998 = vmul.u32 %v934, 256
        %v999 = vmul.u32 %v935, 256
        %v1000 = vmul.u32 %v936, 256
        %v1001 = vmul.u32 %v937, 256
        %v1002 = vmul.u32 %v938, 256
        %v1003 = vsub.s32 255, %v440
        %v1004 = vsub.s32 255, %v441
        %v1005 = vadd.s32 %v939, %v1003
        %v1006 = vadd.s32 %v940, %v1004
        %v1007 = vadd.s32 %v941, %v1003
        %v1008 = vadd.s32 %v942, %v1004
        %v1009 = vadd.s32 %v943, %v1003
        %v1010 = vadd.s32 %v944, %v1004
        %v1011 = vadd.s32 %v945, %v1003
        %v1012 = vadd.s32 %v946, %v1004
        %v1013 = vadd.s32 %v947, %v1003
        %v1014 = vadd.s32 %v948, %v1004
        %v1015 = vadd.s32 %v949, %v1003
        %v1016 = vadd.s32 %v950, %v1004
        %v1017 = vadd.s32 %v951, %v1003
        %v1018 = vadd.s32 %v952, %v1004
        %v1019 = vadd.s32 %v953, %v1003
        %v1020 = vadd.s32 %v954, %v1004
        %v1021 = vadd.s32 %v955, %v1003
        %v1022 = vadd.s32 %v956, %v1004
        %v1023 = vadd.s32 %v957, %v1003
        %v1024 = vadd.s32 %v958, %v1004
        %v1025 = vadd.s32 %v959, %v1003
        %v1026 = vadd.s32 %v960, %v1004
        %v1027 = vadd.s32 %v961, %v1003
        %v1028 = vadd.s32 %v962, %v1004
        %v1029 = vadd.s32 %v963, %v1003
        %v1030 = vadd.s32 %v964, %v1004
        %v1031 = vadd.s32 %v965, %v1003
        %v1032 = vadd.s32 %v966, %v1004
        %v1033 = vadd.s32 %v967, %v1003
        %v1034 = vadd.s32 %v968, %v1004
        %v1035 = vadd.s32 %v969, %v1003
        %v1036 = vadd.s32 %v970, %v1004
        %v1037 = vadd.s32 %v971, %v1003
        %v1038 = vadd.s32 %v972, %v1004
        %v1039 = vadd.s32 %v973, %v1003
        %v1040 = vadd.s32 %v974, %v1004
        %v1041 = vadd.s32 %v975, %v1003
        %v1042 = vadd.s32 %v976, %v1004
        %v1043 = vadd.s32 %v977, %v1003
        %v1044 = vadd.s32 %v978, %v1004
        %v1045 = vadd.s32 %v979, %v1003
        %v1046 = vadd.s32 %v980, %v1004
        %v1047 = vadd.s32 %v981, %v1003
        %v1048 = vadd.s32 %v982, %v1004
        %v1049 = vadd.s32 %v983, %v1003
        %v1050 = vadd.s32 %v984, %v1004
        %v1051 = vadd.s32 %v985, %v1003
        %v1052 = vadd.s32 %v986, %v1004
        %v1053 = vadd.s32 %v987, %v1003
        %v1054 = vadd.s32 %v988, %v1004
        %v1055 = vadd.s32 %v989, %v1003
        %v1056 = vadd.s32 %v990, %v1004
        %v1057 = vadd.s32 %v991, %v1003
        %v1058 = vadd.s32 %v992, %v1004
        %v1059 = vadd.s32 %v993, %v1003
        %v1060 = vadd.s32 %v994, %v1004
        %v1061 = vadd.s32 %v995, %v1003
        %v1062 = vadd.s32 %v996, %v1004
        %v1063 = vadd.s32 %v997, %v1003
        %v1064 = vadd.s32 %v998, %v1004
        %v1065 = vadd.s32 %v999, %v1003
        %v1066 = vadd.s32 %v1000, %v1004
        %v1067 = vadd.s32 %v1001, %v1003
        %v1068 = vadd.s32 %v1002, %v1004
        loop: start=0, step=1, limit=9
        $region53: #{tpu_custom_call.1} parent=35 // loop_pre_header
          _
        $region54: #{tpu_custom_call.1} parent=35 // loop_header
          %s1070 = sphi 0, %s1074
          %p1071 = scmp.ge.s32.totalorder %s1070, 9
          %v1075 = vphi %v1005, %v2100
          %v1076 = vphi %v1006, %v2101
          %v1077 = vphi %v1007, %v2102
          %v1078 = vphi %v1008, %v2103
          %v1079 = vphi %v1009, %v2104
          %v1080 = vphi %v1010, %v2105
          %v1081 = vphi %v1011, %v2106
          %v1082 = vphi %v1012, %v2107
          %v1083 = vphi %v1013, %v2108
          %v1084 = vphi %v1014, %v2109
          %v1085 = vphi %v1015, %v2110
          %v1086 = vphi %v1016, %v2111
          %v1087 = vphi %v1017, %v2112
          %v1088 = vphi %v1018, %v2113
          %v1089 = vphi %v1019, %v2114
          %v1090 = vphi %v1020, %v2115
          %v1091 = vphi %v1021, %v2116
          %v1092 = vphi %v1022, %v2117
          %v1093 = vphi %v1023, %v2118
          %v1094 = vphi %v1024, %v2119
          %v1095 = vphi %v1025, %v2120
          %v1096 = vphi %v1026, %v2121
          %v1097 = vphi %v1027, %v2122
          %v1098 = vphi %v1028, %v2123
          %v1099 = vphi %v1029, %v2124
          %v1100 = vphi %v1030, %v2125
          %v1101 = vphi %v1031, %v2126
          %v1102 = vphi %v1032, %v2127
          %v1103 = vphi %v1033, %v2128
          %v1104 = vphi %v1034, %v2129
          %v1105 = vphi %v1035, %v2130
          %v1106 = vphi %v1036, %v2131
          %v1107 = vphi %v1037, %v2132
          %v1108 = vphi %v1038, %v2133
          %v1109 = vphi %v1039, %v2134
          %v1110 = vphi %v1040, %v2135
          %v1111 = vphi %v1041, %v2136
          %v1112 = vphi %v1042, %v2137
          %v1113 = vphi %v1043, %v2138
          %v1114 = vphi %v1044, %v2139
          %v1115 = vphi %v1045, %v2140
          %v1116 = vphi %v1046, %v2141
          %v1117 = vphi %v1047, %v2142
          %v1118 = vphi %v1048, %v2143
          %v1119 = vphi %v1049, %v2144
          %v1120 = vphi %v1050, %v2145
          %v1121 = vphi %v1051, %v2146
          %v1122 = vphi %v1052, %v2147
          %v1123 = vphi %v1053, %v2148
          %v1124 = vphi %v1054, %v2149
          %v1125 = vphi %v1055, %v2150
          %v1126 = vphi %v1056, %v2151
          %v1127 = vphi %v1057, %v2152
          %v1128 = vphi %v1058, %v2153
          %v1129 = vphi %v1059, %v2154
          %v1130 = vphi %v1060, %v2155
          %v1131 = vphi %v1061, %v2156
          %v1132 = vphi %v1062, %v2157
          %v1133 = vphi %v1063, %v2158
          %v1134 = vphi %v1064, %v2159
          %v1135 = vphi %v1065, %v2160
          %v1136 = vphi %v1066, %v2161
          %v1137 = vphi %v1067, %v2162
          %v1138 = vphi %v1068, %v2163
          %v1139 = vphi -inf, %v2164
          %v1140 = vphi -inf, %v2165
          %v1141 = vphi -inf, %v2166
          %v1142 = vphi -inf, %v2167
          %v1143 = vphi -inf, %v2168
          %v1144 = vphi -inf, %v2169
          %v1145 = vphi -inf, %v2170
          %v1146 = vphi -inf, %v2171
          %v1147 = vphi -inf, %v2172
          %v1148 = vphi -inf, %v2173
          %v1149 = vphi -inf, %v2174
          %v1150 = vphi -inf, %v2175
          %v1151 = vphi -inf, %v2176
          %v1152 = vphi -inf, %v2177
          %v1153 = vphi -inf, %v2178
          %v1154 = vphi -inf, %v2179
          %v1155 = vphi -inf, %v2180
          %v1156 = vphi -inf, %v2181
          %v1157 = vphi -inf, %v2182
          %v1158 = vphi -inf, %v2183
          %v1159 = vphi -inf, %v2184
          %v1160 = vphi -inf, %v2185
          %v1161 = vphi -inf, %v2186
          %v1162 = vphi -inf, %v2187
          %v1163 = vphi -inf, %v2188
          %v1164 = vphi -inf, %v2189
          %v1165 = vphi -inf, %v2190
          %v1166 = vphi -inf, %v2191
          %v1167 = vphi -inf, %v2192
          %v1168 = vphi -inf, %v2193
          %v1169 = vphi -inf, %v2194
          %v1170 = vphi -inf, %v2195
        $region55: #{tpu_custom_call.1} parent=35 // loop_header_branch
          %1073 = sbr.rel (%p1071) target = $region59
        $region56: #{tpu_custom_call.1} parent=35 // loop_body
          %vm1171 = vcmp.gt.s32.totalorder %v1075, %v1076
          %v1172 = vsel %vm1171, %v1075, %v1076
          %v1173 = vand.u32 %v1172, 65535
          %v1174 = vshra.s32 %v1172, 16
          %v1175 = vcvt.s32.f32 %v1173
          %v1176 = vcvt.s32.f32 %v1174
          %1177 = vmax.xlane.f32.xlu0 %v1176
          %v1178 = vpop.xlane.xlu0 %1177
          %vm1179 = vcmp.eq.f32.partialorder %v1176, %v1178
          %v1180 = vsel %vm1179, %v1175, -inf
          %1181 = vmax.xlane.f32.xlu0 %v1180
          %v1182 = vpop.xlane.xlu0 %1181
          %v1183 = vcvt.f32.s32 %v1182
          %v1184 = vcvt.f32.s32 %v1178
          %v1185 = vshll.u32 %v1184, 16
          %v1186 = vadd.s32 %v1185, %v1183
          %vm1187 = vcmp.gt.s32.totalorder %v1077, %v1078
          %v1188 = vsel %vm1187, %v1077, %v1078
          %v1189 = vand.u32 %v1188, 65535
          %v1190 = vshra.s32 %v1188, 16
          %v1191 = vcvt.s32.f32 %v1189
          %v1192 = vcvt.s32.f32 %v1190
          %1193 = vmax.xlane.f32.xlu0 %v1192
          %v1194 = vpop.xlane.xlu0 %1193
          %vm1195 = vcmp.eq.f32.partialorder %v1192, %v1194
          %v1196 = vsel %vm1195, %v1191, -inf
          %1197 = vmax.xlane.f32.xlu0 %v1196
          %v1198 = vpop.xlane.xlu0 %1197
          %v1199 = vcvt.f32.s32 %v1198
          %v1200 = vcvt.f32.s32 %v1194
          %v1201 = vshll.u32 %v1200, 16
          %v1202 = vadd.s32 %v1201, %v1199
          %vm1203 = vcmp.gt.s32.totalorder %v1079, %v1080
          %v1204 = vsel %vm1203, %v1079, %v1080
          %v1205 = vand.u32 %v1204, 65535
          %v1206 = vshra.s32 %v1204, 16
          %v1207 = vcvt.s32.f32 %v1205
          %v1208 = vcvt.s32.f32 %v1206
          %1209 = vmax.xlane.f32.xlu0 %v1208
          %v1210 = vpop.xlane.xlu0 %1209
          %vm1211 = vcmp.eq.f32.partialorder %v1208, %v1210
          %v1212 = vsel %vm1211, %v1207, -inf
          %1213 = vmax.xlane.f32.xlu0 %v1212
          %v1214 = vpop.xlane.xlu0 %1213
          %v1215 = vcvt.f32.s32 %v1214
          %v1216 = vcvt.f32.s32 %v1210
          %v1217 = vshll.u32 %v1216, 16
          %v1218 = vadd.s32 %v1217, %v1215
          %vm1219 = vcmp.gt.s32.totalorder %v1081, %v1082
          %v1220 = vsel %vm1219, %v1081, %v1082
          %v1221 = vand.u32 %v1220, 65535
          %v1222 = vshra.s32 %v1220, 16
          %v1223 = vcvt.s32.f32 %v1221
          %v1224 = vcvt.s32.f32 %v1222
          %1225 = vmax.xlane.f32.xlu0 %v1224
          %v1226 = vpop.xlane.xlu0 %1225
          %vm1227 = vcmp.eq.f32.partialorder %v1224, %v1226
          %v1228 = vsel %vm1227, %v1223, -inf
          %1229 = vmax.xlane.f32.xlu0 %v1228
          %v1230 = vpop.xlane.xlu0 %1229
          %v1231 = vcvt.f32.s32 %v1230
          %v1232 = vcvt.f32.s32 %v1226
          %v1233 = vshll.u32 %v1232, 16
          %v1234 = vadd.s32 %v1233, %v1231
          %vm1235 = vcmp.gt.s32.totalorder %v1083, %v1084
          %v1236 = vsel %vm1235, %v1083, %v1084
          %v1237 = vand.u32 %v1236, 65535
          %v1238 = vshra.s32 %v1236, 16
          %v1239 = vcvt.s32.f32 %v1237
          %v1240 = vcvt.s32.f32 %v1238
          %1241 = vmax.xlane.f32.xlu0 %v1240
          %v1242 = vpop.xlane.xlu0 %1241
          %vm1243 = vcmp.eq.f32.partialorder %v1240, %v1242
          %v1244 = vsel %vm1243, %v1239, -inf
          %1245 = vmax.xlane.f32.xlu0 %v1244
          %v1246 = vpop.xlane.xlu0 %1245
          %v1247 = vcvt.f32.s32 %v1246
          %v1248 = vcvt.f32.s32 %v1242
          %v1249 = vshll.u32 %v1248, 16
          %v1250 = vadd.s32 %v1249, %v1247
          %vm1251 = vcmp.gt.s32.totalorder %v1085, %v1086
          %v1252 = vsel %vm1251, %v1085, %v1086
          %v1253 = vand.u32 %v1252, 65535
          %v1254 = vshra.s32 %v1252, 16
          %v1255 = vcvt.s32.f32 %v1253
          %v1256 = vcvt.s32.f32 %v1254
          %1257 = vmax.xlane.f32.xlu0 %v1256
          %v1258 = vpop.xlane.xlu0 %1257
          %vm1259 = vcmp.eq.f32.partialorder %v1256, %v1258
          %v1260 = vsel %vm1259, %v1255, -inf
          %1261 = vmax.xlane.f32.xlu0 %v1260
          %v1262 = vpop.xlane.xlu0 %1261
          %v1263 = vcvt.f32.s32 %v1262
          %v1264 = vcvt.f32.s32 %v1258
          %v1265 = vshll.u32 %v1264, 16
          %v1266 = vadd.s32 %v1265, %v1263
          %vm1267 = vcmp.gt.s32.totalorder %v1087, %v1088
          %v1268 = vsel %vm1267, %v1087, %v1088
          %v1269 = vand.u32 %v1268, 65535
          %v1270 = vshra.s32 %v1268, 16
          %v1271 = vcvt.s32.f32 %v1269
          %v1272 = vcvt.s32.f32 %v1270
          %1273 = vmax.xlane.f32.xlu0 %v1272
          %v1274 = vpop.xlane.xlu0 %1273
          %vm1275 = vcmp.eq.f32.partialorder %v1272, %v1274
          %v1276 = vsel %vm1275, %v1271, -inf
          %1277 = vmax.xlane.f32.xlu0 %v1276
          %v1278 = vpop.xlane.xlu0 %1277
          %v1279 = vcvt.f32.s32 %v1278
          %v1280 = vcvt.f32.s32 %v1274
          %v1281 = vshll.u32 %v1280, 16
          %v1282 = vadd.s32 %v1281, %v1279
          %vm1283 = vcmp.gt.s32.totalorder %v1089, %v1090
          %v1284 = vsel %vm1283, %v1089, %v1090
          %v1285 = vand.u32 %v1284, 65535
          %v1286 = vshra.s32 %v1284, 16
          %v1287 = vcvt.s32.f32 %v1285
          %v1288 = vcvt.s32.f32 %v1286
          %1289 = vmax.xlane.f32.xlu0 %v1288
          %v1290 = vpop.xlane.xlu0 %1289
          %vm1291 = vcmp.eq.f32.partialorder %v1288, %v1290
          %v1292 = vsel %vm1291, %v1287, -inf
          %1293 = vmax.xlane.f32.xlu0 %v1292
          %v1294 = vpop.xlane.xlu0 %1293
          %v1295 = vcvt.f32.s32 %v1294
          %v1296 = vcvt.f32.s32 %v1290
          %v1297 = vshll.u32 %v1296, 16
          %v1298 = vadd.s32 %v1297, %v1295
          %vm1299 = vcmp.gt.s32.totalorder %v1091, %v1092
          %v1300 = vsel %vm1299, %v1091, %v1092
          %v1301 = vand.u32 %v1300, 65535
          %v1302 = vshra.s32 %v1300, 16
          %v1303 = vcvt.s32.f32 %v1301
          %v1304 = vcvt.s32.f32 %v1302
          %1305 = vmax.xlane.f32.xlu0 %v1304
          %v1306 = vpop.xlane.xlu0 %1305
          %vm1307 = vcmp.eq.f32.partialorder %v1304, %v1306
          %v1308 = vsel %vm1307, %v1303, -inf
          %1309 = vmax.xlane.f32.xlu0 %v1308
          %v1310 = vpop.xlane.xlu0 %1309
          %v1311 = vcvt.f32.s32 %v1310
          %v1312 = vcvt.f32.s32 %v1306
          %v1313 = vshll.u32 %v1312, 16
          %v1314 = vadd.s32 %v1313, %v1311
          %vm1315 = vcmp.gt.s32.totalorder %v1093, %v1094
          %v1316 = vsel %vm1315, %v1093, %v1094
          %v1317 = vand.u32 %v1316, 65535
          %v1318 = vshra.s32 %v1316, 16
          %v1319 = vcvt.s32.f32 %v1317
          %v1320 = vcvt.s32.f32 %v1318
          %1321 = vmax.xlane.f32.xlu0 %v1320
          %v1322 = vpop.xlane.xlu0 %1321
          %vm1323 = vcmp.eq.f32.partialorder %v1320, %v1322
          %v1324 = vsel %vm1323, %v1319, -inf
          %1325 = vmax.xlane.f32.xlu0 %v1324
          %v1326 = vpop.xlane.xlu0 %1325
          %v1327 = vcvt.f32.s32 %v1326
          %v1328 = vcvt.f32.s32 %v1322
          %v1329 = vshll.u32 %v1328, 16
          %v1330 = vadd.s32 %v1329, %v1327
          %vm1331 = vcmp.gt.s32.totalorder %v1095, %v1096
          %v1332 = vsel %vm1331, %v1095, %v1096
          %v1333 = vand.u32 %v1332, 65535
          %v1334 = vshra.s32 %v1332, 16
          %v1335 = vcvt.s32.f32 %v1333
          %v1336 = vcvt.s32.f32 %v1334
          %1337 = vmax.xlane.f32.xlu0 %v1336
          %v1338 = vpop.xlane.xlu0 %1337
          %vm1339 = vcmp.eq.f32.partialorder %v1336, %v1338
          %v1340 = vsel %vm1339, %v1335, -inf
          %1341 = vmax.xlane.f32.xlu0 %v1340
          %v1342 = vpop.xlane.xlu0 %1341
          %v1343 = vcvt.f32.s32 %v1342
          %v1344 = vcvt.f32.s32 %v1338
          %v1345 = vshll.u32 %v1344, 16
          %v1346 = vadd.s32 %v1345, %v1343
          %vm1347 = vcmp.gt.s32.totalorder %v1097, %v1098
          %v1348 = vsel %vm1347, %v1097, %v1098
          %v1349 = vand.u32 %v1348, 65535
          %v1350 = vshra.s32 %v1348, 16
          %v1351 = vcvt.s32.f32 %v1349
          %v1352 = vcvt.s32.f32 %v1350
          %1353 = vmax.xlane.f32.xlu0 %v1352
          %v1354 = vpop.xlane.xlu0 %1353
          %vm1355 = vcmp.eq.f32.partialorder %v1352, %v1354
          %v1356 = vsel %vm1355, %v1351, -inf
          %1357 = vmax.xlane.f32.xlu0 %v1356
          %v1358 = vpop.xlane.xlu0 %1357
          %v1359 = vcvt.f32.s32 %v1358
          %v1360 = vcvt.f32.s32 %v1354
          %v1361 = vshll.u32 %v1360, 16
          %v1362 = vadd.s32 %v1361, %v1359
          %vm1363 = vcmp.gt.s32.totalorder %v1099, %v1100
          %v1364 = vsel %vm1363, %v1099, %v1100
          %v1365 = vand.u32 %v1364, 65535
          %v1366 = vshra.s32 %v1364, 16
          %v1367 = vcvt.s32.f32 %v1365
          %v1368 = vcvt.s32.f32 %v1366
          %1369 = vmax.xlane.f32.xlu0 %v1368
          %v1370 = vpop.xlane.xlu0 %1369
          %vm1371 = vcmp.eq.f32.partialorder %v1368, %v1370
          %v1372 = vsel %vm1371, %v1367, -inf
          %1373 = vmax.xlane.f32.xlu0 %v1372
          %v1374 = vpop.xlane.xlu0 %1373
          %v1375 = vcvt.f32.s32 %v1374
          %v1376 = vcvt.f32.s32 %v1370
          %v1377 = vshll.u32 %v1376, 16
          %v1378 = vadd.s32 %v1377, %v1375
          %vm1379 = vcmp.gt.s32.totalorder %v1101, %v1102
          %v1380 = vsel %vm1379, %v1101, %v1102
          %v1381 = vand.u32 %v1380, 65535
          %v1382 = vshra.s32 %v1380, 16
          %v1383 = vcvt.s32.f32 %v1381
          %v1384 = vcvt.s32.f32 %v1382
          %1385 = vmax.xlane.f32.xlu0 %v1384
          %v1386 = vpop.xlane.xlu0 %1385
          %vm1387 = vcmp.eq.f32.partialorder %v1384, %v1386
          %v1388 = vsel %vm1387, %v1383, -inf
          %1389 = vmax.xlane.f32.xlu0 %v1388
          %v1390 = vpop.xlane.xlu0 %1389
          %v1391 = vcvt.f32.s32 %v1390
          %v1392 = vcvt.f32.s32 %v1386
          %v1393 = vshll.u32 %v1392, 16
          %v1394 = vadd.s32 %v1393, %v1391
          %vm1395 = vcmp.gt.s32.totalorder %v1103, %v1104
          %v1396 = vsel %vm1395, %v1103, %v1104
          %v1397 = vand.u32 %v1396, 65535
          %v1398 = vshra.s32 %v1396, 16
          %v1399 = vcvt.s32.f32 %v1397
          %v1400 = vcvt.s32.f32 %v1398
          %1401 = vmax.xlane.f32.xlu0 %v1400
          %v1402 = vpop.xlane.xlu0 %1401
          %vm1403 = vcmp.eq.f32.partialorder %v1400, %v1402
          %v1404 = vsel %vm1403, %v1399, -inf
          %1405 = vmax.xlane.f32.xlu0 %v1404
          %v1406 = vpop.xlane.xlu0 %1405
          %v1407 = vcvt.f32.s32 %v1406
          %v1408 = vcvt.f32.s32 %v1402
          %v1409 = vshll.u32 %v1408, 16
          %v1410 = vadd.s32 %v1409, %v1407
          %vm1411 = vcmp.gt.s32.totalorder %v1105, %v1106
          %v1412 = vsel %vm1411, %v1105, %v1106
          %v1413 = vand.u32 %v1412, 65535
          %v1414 = vshra.s32 %v1412, 16
          %v1415 = vcvt.s32.f32 %v1413
          %v1416 = vcvt.s32.f32 %v1414
          %1417 = vmax.xlane.f32.xlu0 %v1416
          %v1418 = vpop.xlane.xlu0 %1417
          %vm1419 = vcmp.eq.f32.partialorder %v1416, %v1418
          %v1420 = vsel %vm1419, %v1415, -inf
          %1421 = vmax.xlane.f32.xlu0 %v1420
          %v1422 = vpop.xlane.xlu0 %1421
          %v1423 = vcvt.f32.s32 %v1422
          %v1424 = vcvt.f32.s32 %v1418
          %v1425 = vshll.u32 %v1424, 16
          %v1426 = vadd.s32 %v1425, %v1423
          %vm1427 = vcmp.gt.s32.totalorder %v1107, %v1108
          %v1428 = vsel %vm1427, %v1107, %v1108
          %v1429 = vand.u32 %v1428, 65535
          %v1430 = vshra.s32 %v1428, 16
          %v1431 = vcvt.s32.f32 %v1429
          %v1432 = vcvt.s32.f32 %v1430
          %1433 = vmax.xlane.f32.xlu0 %v1432
          %v1434 = vpop.xlane.xlu0 %1433
          %vm1435 = vcmp.eq.f32.partialorder %v1432, %v1434
          %v1436 = vsel %vm1435, %v1431, -inf
          %1437 = vmax.xlane.f32.xlu0 %v1436
          %v1438 = vpop.xlane.xlu0 %1437
          %v1439 = vcvt.f32.s32 %v1438
          %v1440 = vcvt.f32.s32 %v1434
          %v1441 = vshll.u32 %v1440, 16
          %v1442 = vadd.s32 %v1441, %v1439
          %vm1443 = vcmp.gt.s32.totalorder %v1109, %v1110
          %v1444 = vsel %vm1443, %v1109, %v1110
          %v1445 = vand.u32 %v1444, 65535
          %v1446 = vshra.s32 %v1444, 16
          %v1447 = vcvt.s32.f32 %v1445
          %v1448 = vcvt.s32.f32 %v1446
          %1449 = vmax.xlane.f32.xlu0 %v1448
          %v1450 = vpop.xlane.xlu0 %1449
          %vm1451 = vcmp.eq.f32.partialorder %v1448, %v1450
          %v1452 = vsel %vm1451, %v1447, -inf
          %1453 = vmax.xlane.f32.xlu0 %v1452
          %v1454 = vpop.xlane.xlu0 %1453
          %v1455 = vcvt.f32.s32 %v1454
          %v1456 = vcvt.f32.s32 %v1450
          %v1457 = vshll.u32 %v1456, 16
          %v1458 = vadd.s32 %v1457, %v1455
          %vm1459 = vcmp.gt.s32.totalorder %v1111, %v1112
          %v1460 = vsel %vm1459, %v1111, %v1112
          %v1461 = vand.u32 %v1460, 65535
          %v1462 = vshra.s32 %v1460, 16
          %v1463 = vcvt.s32.f32 %v1461
          %v1464 = vcvt.s32.f32 %v1462
          %1465 = vmax.xlane.f32.xlu0 %v1464
          %v1466 = vpop.xlane.xlu0 %1465
          %vm1467 = vcmp.eq.f32.partialorder %v1464, %v1466
          %v1468 = vsel %vm1467, %v1463, -inf
          %1469 = vmax.xlane.f32.xlu0 %v1468
          %v1470 = vpop.xlane.xlu0 %1469
          %v1471 = vcvt.f32.s32 %v1470
          %v1472 = vcvt.f32.s32 %v1466
          %v1473 = vshll.u32 %v1472, 16
          %v1474 = vadd.s32 %v1473, %v1471
          %vm1475 = vcmp.gt.s32.totalorder %v1113, %v1114
          %v1476 = vsel %vm1475, %v1113, %v1114
          %v1477 = vand.u32 %v1476, 65535
          %v1478 = vshra.s32 %v1476, 16
          %v1479 = vcvt.s32.f32 %v1477
          %v1480 = vcvt.s32.f32 %v1478
          %1481 = vmax.xlane.f32.xlu0 %v1480
          %v1482 = vpop.xlane.xlu0 %1481
          %vm1483 = vcmp.eq.f32.partialorder %v1480, %v1482
          %v1484 = vsel %vm1483, %v1479, -inf
          %1485 = vmax.xlane.f32.xlu0 %v1484
          %v1486 = vpop.xlane.xlu0 %1485
          %v1487 = vcvt.f32.s32 %v1486
          %v1488 = vcvt.f32.s32 %v1482
          %v1489 = vshll.u32 %v1488, 16
          %v1490 = vadd.s32 %v1489, %v1487
          %vm1491 = vcmp.gt.s32.totalorder %v1115, %v1116
          %v1492 = vsel %vm1491, %v1115, %v1116
          %v1493 = vand.u32 %v1492, 65535
          %v1494 = vshra.s32 %v1492, 16
          %v1495 = vcvt.s32.f32 %v1493
          %v1496 = vcvt.s32.f32 %v1494
          %1497 = vmax.xlane.f32.xlu0 %v1496
          %v1498 = vpop.xlane.xlu0 %1497
          %vm1499 = vcmp.eq.f32.partialorder %v1496, %v1498
          %v1500 = vsel %vm1499, %v1495, -inf
          %1501 = vmax.xlane.f32.xlu0 %v1500
          %v1502 = vpop.xlane.xlu0 %1501
          %v1503 = vcvt.f32.s32 %v1502
          %v1504 = vcvt.f32.s32 %v1498
          %v1505 = vshll.u32 %v1504, 16
          %v1506 = vadd.s32 %v1505, %v1503
          %vm1507 = vcmp.gt.s32.totalorder %v1117, %v1118
          %v1508 = vsel %vm1507, %v1117, %v1118
          %v1509 = vand.u32 %v1508, 65535
          %v1510 = vshra.s32 %v1508, 16
          %v1511 = vcvt.s32.f32 %v1509
          %v1512 = vcvt.s32.f32 %v1510
          %1513 = vmax.xlane.f32.xlu0 %v1512
          %v1514 = vpop.xlane.xlu0 %1513
          %vm1515 = vcmp.eq.f32.partialorder %v1512, %v1514
          %v1516 = vsel %vm1515, %v1511, -inf
          %1517 = vmax.xlane.f32.xlu0 %v1516
          %v1518 = vpop.xlane.xlu0 %1517
          %v1519 = vcvt.f32.s32 %v1518
          %v1520 = vcvt.f32.s32 %v1514
          %v1521 = vshll.u32 %v1520, 16
          %v1522 = vadd.s32 %v1521, %v1519
          %vm1523 = vcmp.gt.s32.totalorder %v1119, %v1120
          %v1524 = vsel %vm1523, %v1119, %v1120
          %v1525 = vand.u32 %v1524, 65535
          %v1526 = vshra.s32 %v1524, 16
          %v1527 = vcvt.s32.f32 %v1525
          %v1528 = vcvt.s32.f32 %v1526
          %1529 = vmax.xlane.f32.xlu0 %v1528
          %v1530 = vpop.xlane.xlu0 %1529
          %vm1531 = vcmp.eq.f32.partialorder %v1528, %v1530
          %v1532 = vsel %vm1531, %v1527, -inf
          %1533 = vmax.xlane.f32.xlu0 %v1532
          %v1534 = vpop.xlane.xlu0 %1533
          %v1535 = vcvt.f32.s32 %v1534
          %v1536 = vcvt.f32.s32 %v1530
          %v1537 = vshll.u32 %v1536, 16
          %v1538 = vadd.s32 %v1537, %v1535
          %vm1539 = vcmp.gt.s32.totalorder %v1121, %v1122
          %v1540 = vsel %vm1539, %v1121, %v1122
          %v1541 = vand.u32 %v1540, 65535
          %v1542 = vshra.s32 %v1540, 16
          %v1543 = vcvt.s32.f32 %v1541
          %v1544 = vcvt.s32.f32 %v1542
          %1545 = vmax.xlane.f32.xlu0 %v1544
          %v1546 = vpop.xlane.xlu0 %1545
          %vm1547 = vcmp.eq.f32.partialorder %v1544, %v1546
          %v1548 = vsel %vm1547, %v1543, -inf
          %1549 = vmax.xlane.f32.xlu0 %v1548
          %v1550 = vpop.xlane.xlu0 %1549
          %v1551 = vcvt.f32.s32 %v1550
          %v1552 = vcvt.f32.s32 %v1546
          %v1553 = vshll.u32 %v1552, 16
          %v1554 = vadd.s32 %v1553, %v1551
          %vm1555 = vcmp.gt.s32.totalorder %v1123, %v1124
          %v1556 = vsel %vm1555, %v1123, %v1124
          %v1557 = vand.u32 %v1556, 65535
          %v1558 = vshra.s32 %v1556, 16
          %v1559 = vcvt.s32.f32 %v1557
          %v1560 = vcvt.s32.f32 %v1558
          %1561 = vmax.xlane.f32.xlu0 %v1560
          %v1562 = vpop.xlane.xlu0 %1561
          %vm1563 = vcmp.eq.f32.partialorder %v1560, %v1562
          %v1564 = vsel %vm1563, %v1559, -inf
          %1565 = vmax.xlane.f32.xlu0 %v1564
          %v1566 = vpop.xlane.xlu0 %1565
          %v1567 = vcvt.f32.s32 %v1566
          %v1568 = vcvt.f32.s32 %v1562
          %v1569 = vshll.u32 %v1568, 16
          %v1570 = vadd.s32 %v1569, %v1567
          %vm1571 = vcmp.gt.s32.totalorder %v1125, %v1126
          %v1572 = vsel %vm1571, %v1125, %v1126
          %v1573 = vand.u32 %v1572, 65535
          %v1574 = vshra.s32 %v1572, 16
          %v1575 = vcvt.s32.f32 %v1573
          %v1576 = vcvt.s32.f32 %v1574
          %1577 = vmax.xlane.f32.xlu0 %v1576
          %v1578 = vpop.xlane.xlu0 %1577
          %vm1579 = vcmp.eq.f32.partialorder %v1576, %v1578
          %v1580 = vsel %vm1579, %v1575, -inf
          %1581 = vmax.xlane.f32.xlu0 %v1580
          %v1582 = vpop.xlane.xlu0 %1581
          %v1583 = vcvt.f32.s32 %v1582
          %v1584 = vcvt.f32.s32 %v1578
          %v1585 = vshll.u32 %v1584, 16
          %v1586 = vadd.s32 %v1585, %v1583
          %vm1587 = vcmp.gt.s32.totalorder %v1127, %v1128
          %v1588 = vsel %vm1587, %v1127, %v1128
          %v1589 = vand.u32 %v1588, 65535
          %v1590 = vshra.s32 %v1588, 16
          %v1591 = vcvt.s32.f32 %v1589
          %v1592 = vcvt.s32.f32 %v1590
          %1593 = vmax.xlane.f32.xlu0 %v1592
          %v1594 = vpop.xlane.xlu0 %1593
          %vm1595 = vcmp.eq.f32.partialorder %v1592, %v1594
          %v1596 = vsel %vm1595, %v1591, -inf
          %1597 = vmax.xlane.f32.xlu0 %v1596
          %v1598 = vpop.xlane.xlu0 %1597
          %v1599 = vcvt.f32.s32 %v1598
          %v1600 = vcvt.f32.s32 %v1594
          %v1601 = vshll.u32 %v1600, 16
          %v1602 = vadd.s32 %v1601, %v1599
          %vm1603 = vcmp.gt.s32.totalorder %v1129, %v1130
          %v1604 = vsel %vm1603, %v1129, %v1130
          %v1605 = vand.u32 %v1604, 65535
          %v1606 = vshra.s32 %v1604, 16
          %v1607 = vcvt.s32.f32 %v1605
          %v1608 = vcvt.s32.f32 %v1606
          %1609 = vmax.xlane.f32.xlu0 %v1608
          %v1610 = vpop.xlane.xlu0 %1609
          %vm1611 = vcmp.eq.f32.partialorder %v1608, %v1610
          %v1612 = vsel %vm1611, %v1607, -inf
          %1613 = vmax.xlane.f32.xlu0 %v1612
          %v1614 = vpop.xlane.xlu0 %1613
          %v1615 = vcvt.f32.s32 %v1614
          %v1616 = vcvt.f32.s32 %v1610
          %v1617 = vshll.u32 %v1616, 16
          %v1618 = vadd.s32 %v1617, %v1615
          %vm1619 = vcmp.gt.s32.totalorder %v1131, %v1132
          %v1620 = vsel %vm1619, %v1131, %v1132
          %v1621 = vand.u32 %v1620, 65535
          %v1622 = vshra.s32 %v1620, 16
          %v1623 = vcvt.s32.f32 %v1621
          %v1624 = vcvt.s32.f32 %v1622
          %1625 = vmax.xlane.f32.xlu0 %v1624
          %v1626 = vpop.xlane.xlu0 %1625
          %vm1627 = vcmp.eq.f32.partialorder %v1624, %v1626
          %v1628 = vsel %vm1627, %v1623, -inf
          %1629 = vmax.xlane.f32.xlu0 %v1628
          %v1630 = vpop.xlane.xlu0 %1629
          %v1631 = vcvt.f32.s32 %v1630
          %v1632 = vcvt.f32.s32 %v1626
          %v1633 = vshll.u32 %v1632, 16
          %v1634 = vadd.s32 %v1633, %v1631
          %vm1635 = vcmp.gt.s32.totalorder %v1133, %v1134
          %v1636 = vsel %vm1635, %v1133, %v1134
          %v1637 = vand.u32 %v1636, 65535
          %v1638 = vshra.s32 %v1636, 16
          %v1639 = vcvt.s32.f32 %v1637
          %v1640 = vcvt.s32.f32 %v1638
          %1641 = vmax.xlane.f32.xlu0 %v1640
          %v1642 = vpop.xlane.xlu0 %1641
          %vm1643 = vcmp.eq.f32.partialorder %v1640, %v1642
          %v1644 = vsel %vm1643, %v1639, -inf
          %1645 = vmax.xlane.f32.xlu0 %v1644
          %v1646 = vpop.xlane.xlu0 %1645
          %v1647 = vcvt.f32.s32 %v1646
          %v1648 = vcvt.f32.s32 %v1642
          %v1649 = vshll.u32 %v1648, 16
          %v1650 = vadd.s32 %v1649, %v1647
          %vm1651 = vcmp.gt.s32.totalorder %v1135, %v1136
          %v1652 = vsel %vm1651, %v1135, %v1136
          %v1653 = vand.u32 %v1652, 65535
          %v1654 = vshra.s32 %v1652, 16
          %v1655 = vcvt.s32.f32 %v1653
          %v1656 = vcvt.s32.f32 %v1654
          %1657 = vmax.xlane.f32.xlu0 %v1656
          %v1658 = vpop.xlane.xlu0 %1657
          %vm1659 = vcmp.eq.f32.partialorder %v1656, %v1658
          %v1660 = vsel %vm1659, %v1655, -inf
          %1661 = vmax.xlane.f32.xlu0 %v1660
          %v1662 = vpop.xlane.xlu0 %1661
          %v1663 = vcvt.f32.s32 %v1662
          %v1664 = vcvt.f32.s32 %v1658
          %v1665 = vshll.u32 %v1664, 16
          %v1666 = vadd.s32 %v1665, %v1663
          %vm1667 = vcmp.gt.s32.totalorder %v1137, %v1138
          %v1668 = vsel %vm1667, %v1137, %v1138
          %v1669 = vand.u32 %v1668, 65535
          %v1670 = vshra.s32 %v1668, 16
          %v1671 = vcvt.s32.f32 %v1669
          %v1672 = vcvt.s32.f32 %v1670
          %1673 = vmax.xlane.f32.xlu0 %v1672
          %v1674 = vpop.xlane.xlu0 %1673
          %vm1675 = vcmp.eq.f32.partialorder %v1672, %v1674
          %v1676 = vsel %vm1675, %v1671, -inf
          %1677 = vmax.xlane.f32.xlu0 %v1676
          %v1678 = vpop.xlane.xlu0 %1677
          %v1679 = vcvt.f32.s32 %v1678
          %v1680 = vcvt.f32.s32 %v1674
          %v1681 = vshll.u32 %v1680, 16
          %v1682 = vadd.s32 %v1681, %v1679
          %vm1683 = vcmp.eq.s32.totalorder %v1075, %v1186
          %vm1684 = vcmp.eq.s32.totalorder %v1076, %v1186
          %vm1685 = vcmp.eq.s32.totalorder %v1077, %v1202
          %vm1686 = vcmp.eq.s32.totalorder %v1078, %v1202
          %vm1687 = vcmp.eq.s32.totalorder %v1079, %v1218
          %vm1688 = vcmp.eq.s32.totalorder %v1080, %v1218
          %vm1689 = vcmp.eq.s32.totalorder %v1081, %v1234
          %vm1690 = vcmp.eq.s32.totalorder %v1082, %v1234
          %vm1691 = vcmp.eq.s32.totalorder %v1083, %v1250
          %vm1692 = vcmp.eq.s32.totalorder %v1084, %v1250
          %vm1693 = vcmp.eq.s32.totalorder %v1085, %v1266
          %vm1694 = vcmp.eq.s32.totalorder %v1086, %v1266
          %vm1695 = vcmp.eq.s32.totalorder %v1087, %v1282
          %vm1696 = vcmp.eq.s32.totalorder %v1088, %v1282
          %vm1697 = vcmp.eq.s32.totalorder %v1089, %v1298
          %vm1698 = vcmp.eq.s32.totalorder %v1090, %v1298
          %vm1699 = vcmp.eq.s32.totalorder %v1091, %v1314
          %vm1700 = vcmp.eq.s32.totalorder %v1092, %v1314
          %vm1701 = vcmp.eq.s32.totalorder %v1093, %v1330
          %vm1702 = vcmp.eq.s32.totalorder %v1094, %v1330
          %vm1703 = vcmp.eq.s32.totalorder %v1095, %v1346
          %vm1704 = vcmp.eq.s32.totalorder %v1096, %v1346
          %vm1705 = vcmp.eq.s32.totalorder %v1097, %v1362
          %vm1706 = vcmp.eq.s32.totalorder %v1098, %v1362
          %vm1707 = vcmp.eq.s32.totalorder %v1099, %v1378
          %vm1708 = vcmp.eq.s32.totalorder %v1100, %v1378
          %vm1709 = vcmp.eq.s32.totalorder %v1101, %v1394
          %vm1710 = vcmp.eq.s32.totalorder %v1102, %v1394
          %vm1711 = vcmp.eq.s32.totalorder %v1103, %v1410
          %vm1712 = vcmp.eq.s32.totalorder %v1104, %v1410
          %vm1713 = vcmp.eq.s32.totalorder %v1105, %v1426
          %vm1714 = vcmp.eq.s32.totalorder %v1106, %v1426
          %vm1715 = vcmp.eq.s32.totalorder %v1107, %v1442
          %vm1716 = vcmp.eq.s32.totalorder %v1108, %v1442
          %vm1717 = vcmp.eq.s32.totalorder %v1109, %v1458
          %vm1718 = vcmp.eq.s32.totalorder %v1110, %v1458
          %vm1719 = vcmp.eq.s32.totalorder %v1111, %v1474
          %vm1720 = vcmp.eq.s32.totalorder %v1112, %v1474
          %vm1721 = vcmp.eq.s32.totalorder %v1113, %v1490
          %vm1722 = vcmp.eq.s32.totalorder %v1114, %v1490
          %vm1723 = vcmp.eq.s32.totalorder %v1115, %v1506
          %vm1724 = vcmp.eq.s32.totalorder %v1116, %v1506
          %vm1725 = vcmp.eq.s32.totalorder %v1117, %v1522
          %vm1726 = vcmp.eq.s32.totalorder %v1118, %v1522
          %vm1727 = vcmp.eq.s32.totalorder %v1119, %v1538
          %vm1728 = vcmp.eq.s32.totalorder %v1120, %v1538
          %vm1729 = vcmp.eq.s32.totalorder %v1121, %v1554
          %vm1730 = vcmp.eq.s32.totalorder %v1122, %v1554
          %vm1731 = vcmp.eq.s32.totalorder %v1123, %v1570
          %vm1732 = vcmp.eq.s32.totalorder %v1124, %v1570
          %vm1733 = vcmp.eq.s32.totalorder %v1125, %v1586
          %vm1734 = vcmp.eq.s32.totalorder %v1126, %v1586
          %vm1735 = vcmp.eq.s32.totalorder %v1127, %v1602
          %vm1736 = vcmp.eq.s32.totalorder %v1128, %v1602
          %vm1737 = vcmp.eq.s32.totalorder %v1129, %v1618
          %vm1738 = vcmp.eq.s32.totalorder %v1130, %v1618
          %vm1739 = vcmp.eq.s32.totalorder %v1131, %v1634
          %vm1740 = vcmp.eq.s32.totalorder %v1132, %v1634
          %vm1741 = vcmp.eq.s32.totalorder %v1133, %v1650
          %vm1742 = vcmp.eq.s32.totalorder %v1134, %v1650
          %vm1743 = vcmp.eq.s32.totalorder %v1135, %v1666
          %vm1744 = vcmp.eq.s32.totalorder %v1136, %v1666
          %vm1745 = vcmp.eq.s32.totalorder %v1137, %v1682
          %vm1746 = vcmp.eq.s32.totalorder %v1138, %v1682
          %v1747 = vsel %vm1683, 1.0, 0.0
          %v1748 = vsel %vm1684, 1.0, 0.0
          %v1749 = vsel %vm1685, 1.0, 0.0
          %v1750 = vsel %vm1686, 1.0, 0.0
          %v1751 = vsel %vm1687, 1.0, 0.0
          %v1752 = vsel %vm1688, 1.0, 0.0
          %v1753 = vsel %vm1689, 1.0, 0.0
          %v1754 = vsel %vm1690, 1.0, 0.0
          %v1755 = vsel %vm1691, 1.0, 0.0
          %v1756 = vsel %vm1692, 1.0, 0.0
          %v1757 = vsel %vm1693, 1.0, 0.0
          %v1758 = vsel %vm1694, 1.0, 0.0
          %v1759 = vsel %vm1695, 1.0, 0.0
          %v1760 = vsel %vm1696, 1.0, 0.0
          %v1761 = vsel %vm1697, 1.0, 0.0
          %v1762 = vsel %vm1698, 1.0, 0.0
          %v1763 = vsel %vm1699, 1.0, 0.0
          %v1764 = vsel %vm1700, 1.0, 0.0
          %v1765 = vsel %vm1701, 1.0, 0.0
          %v1766 = vsel %vm1702, 1.0, 0.0
          %v1767 = vsel %vm1703, 1.0, 0.0
          %v1768 = vsel %vm1704, 1.0, 0.0
          %v1769 = vsel %vm1705, 1.0, 0.0
          %v1770 = vsel %vm1706, 1.0, 0.0
          %v1771 = vsel %vm1707, 1.0, 0.0
          %v1772 = vsel %vm1708, 1.0, 0.0
          %v1773 = vsel %vm1709, 1.0, 0.0
          %v1774 = vsel %vm1710, 1.0, 0.0
          %v1775 = vsel %vm1711, 1.0, 0.0
          %v1776 = vsel %vm1712, 1.0, 0.0
          %v1777 = vsel %vm1713, 1.0, 0.0
          %v1778 = vsel %vm1714, 1.0, 0.0
          %v1779 = vsel %vm1715, 1.0, 0.0
          %v1780 = vsel %vm1716, 1.0, 0.0
          %v1781 = vsel %vm1717, 1.0, 0.0
          %v1782 = vsel %vm1718, 1.0, 0.0
          %v1783 = vsel %vm1719, 1.0, 0.0
          %v1784 = vsel %vm1720, 1.0, 0.0
          %v1785 = vsel %vm1721, 1.0, 0.0
          %v1786 = vsel %vm1722, 1.0, 0.0
          %v1787 = vsel %vm1723, 1.0, 0.0
          %v1788 = vsel %vm1724, 1.0, 0.0
          %v1789 = vsel %vm1725, 1.0, 0.0
          %v1790 = vsel %vm1726, 1.0, 0.0
          %v1791 = vsel %vm1727, 1.0, 0.0
          %v1792 = vsel %vm1728, 1.0, 0.0
          %v1793 = vsel %vm1729, 1.0, 0.0
          %v1794 = vsel %vm1730, 1.0, 0.0
          %v1795 = vsel %vm1731, 1.0, 0.0
          %v1796 = vsel %vm1732, 1.0, 0.0
          %v1797 = vsel %vm1733, 1.0, 0.0
          %v1798 = vsel %vm1734, 1.0, 0.0
          %v1799 = vsel %vm1735, 1.0, 0.0
          %v1800 = vsel %vm1736, 1.0, 0.0
          %v1801 = vsel %vm1737, 1.0, 0.0
          %v1802 = vsel %vm1738, 1.0, 0.0
          %v1803 = vsel %vm1739, 1.0, 0.0
          %v1804 = vsel %vm1740, 1.0, 0.0
          %v1805 = vsel %vm1741, 1.0, 0.0
          %v1806 = vsel %vm1742, 1.0, 0.0
          %v1807 = vsel %vm1743, 1.0, 0.0
          %v1808 = vsel %vm1744, 1.0, 0.0
          %v1809 = vsel %vm1745, 1.0, 0.0
          %v1810 = vsel %vm1746, 1.0, 0.0
          %v1811 = vpack.c.bf16 %v1749, %v1747
          %v1812 = vpack.c.bf16 %v1750, %v1748
          %v1813 = vpack.c.bf16 %v1753, %v1751
          %v1814 = vpack.c.bf16 %v1754, %v1752
          %v1815 = vpack.c.bf16 %v1757, %v1755
          %v1816 = vpack.c.bf16 %v1758, %v1756
          %v1817 = vpack.c.bf16 %v1761, %v1759
          %v1818 = vpack.c.bf16 %v1762, %v1760
          %v1819 = vpack.c.bf16 %v1765, %v1763
          %v1820 = vpack.c.bf16 %v1766, %v1764
          %v1821 = vpack.c.bf16 %v1769, %v1767
          %v1822 = vpack.c.bf16 %v1770, %v1768
          %v1823 = vpack.c.bf16 %v1773, %v1771
          %v1824 = vpack.c.bf16 %v1774, %v1772
          %v1825 = vpack.c.bf16 %v1777, %v1775
          %v1826 = vpack.c.bf16 %v1778, %v1776
          %v1827 = vpack.c.bf16 %v1781, %v1779
          %v1828 = vpack.c.bf16 %v1782, %v1780
          %v1829 = vpack.c.bf16 %v1785, %v1783
          %v1830 = vpack.c.bf16 %v1786, %v1784
          %v1831 = vpack.c.bf16 %v1789, %v1787
          %v1832 = vpack.c.bf16 %v1790, %v1788
          %v1833 = vpack.c.bf16 %v1793, %v1791
          %v1834 = vpack.c.bf16 %v1794, %v1792
          %v1835 = vpack.c.bf16 %v1797, %v1795
          %v1836 = vpack.c.bf16 %v1798, %v1796
          %v1837 = vpack.c.bf16 %v1801, %v1799
          %v1838 = vpack.c.bf16 %v1802, %v1800
          %v1839 = vpack.c.bf16 %v1805, %v1803
          %v1840 = vpack.c.bf16 %v1806, %v1804
          %v1841 = vpack.c.bf16 %v1809, %v1807
          %v1842 = vpack.c.bf16 %v1810, %v1808
          %v1875 = vunpack.c.l.b16 %v407
          %v1876 = vunpack.c.l.b16 %v408
          %v1877 = vunpack.c.l.b16 %v409
          %v1878 = vunpack.c.l.b16 %v410
          %v1879 = vunpack.c.l.b16 %v411
          %v1880 = vunpack.c.l.b16 %v412
          %v1881 = vunpack.c.l.b16 %v413
          %v1882 = vunpack.c.l.b16 %v414
          %v1883 = vunpack.c.l.b16 %v415
          %v1884 = vunpack.c.l.b16 %v416
          %v1885 = vunpack.c.l.b16 %v417
          %v1886 = vunpack.c.l.b16 %v418
          %v1887 = vunpack.c.l.b16 %v419
          %v1888 = vunpack.c.l.b16 %v420
          %v1889 = vunpack.c.l.b16 %v421
          %v1890 = vunpack.c.l.b16 %v422
          %v1891 = vunpack.c.l.b16 %v423
          %v1892 = vunpack.c.l.b16 %v424
          %v1893 = vunpack.c.l.b16 %v425
          %v1894 = vunpack.c.l.b16 %v426
          %v1895 = vunpack.c.l.b16 %v427
          %v1896 = vunpack.c.l.b16 %v428
          %v1897 = vunpack.c.l.b16 %v429
          %v1898 = vunpack.c.l.b16 %v430
          %v1899 = vunpack.c.l.b16 %v431
          %v1900 = vunpack.c.l.b16 %v432
          %v1901 = vunpack.c.l.b16 %v433
          %v1902 = vunpack.c.l.b16 %v434
          %v1903 = vunpack.c.l.b16 %v435
          %v1904 = vunpack.c.l.b16 %v436
          %v1905 = vunpack.c.l.b16 %v437
          %v1906 = vunpack.c.l.b16 %v438
          %v1907 = vpack.c.b16 %v1876, %v1875
          %v1908 = vpack.c.b16 %v1878, %v1877
          %v1909 = vpack.c.b16 %v1880, %v1879
          %v1910 = vpack.c.b16 %v1882, %v1881
          %v1911 = vpack.c.b16 %v1884, %v1883
          %v1912 = vpack.c.b16 %v1886, %v1885
          %v1913 = vpack.c.b16 %v1888, %v1887
          %v1914 = vpack.c.b16 %v1890, %v1889
          %v1915 = vpack.c.b16 %v1892, %v1891
          %v1916 = vpack.c.b16 %v1894, %v1893
          %v1917 = vpack.c.b16 %v1896, %v1895
          %v1918 = vpack.c.b16 %v1898, %v1897
          %v1919 = vpack.c.b16 %v1900, %v1899
          %v1920 = vpack.c.b16 %v1902, %v1901
          %v1921 = vpack.c.b16 %v1904, %v1903
          %v1922 = vpack.c.b16 %v1906, %v1905
          %1939 = vmatprep.subr.bf16.mxu0 0
          %1940 = vmatpush1.bf16.msra.mxu0 %v1907
          %1941 = vmatprep.subr.bf16.mxu0 0
          %1942 = vmatpush1.bf16.msra.mxu0 %v1908
          %1943 = vmatprep.subr.bf16.mxu0 0
          %1944 = vmatpush1.bf16.msra.mxu0 %v1909
          %1945 = vmatprep.subr.bf16.mxu0 0
          %1946 = vmatpush1.bf16.msra.mxu0 %v1910
          %1947 = vmatprep.subr.bf16.mxu0 0
          %1948 = vmatpush1.bf16.msra.mxu0 %v1911
          %1949 = vmatprep.subr.bf16.mxu0 0
          %1950 = vmatpush1.bf16.msra.mxu0 %v1912
          %1951 = vmatprep.subr.bf16.mxu0 0
          %1952 = vmatpush1.bf16.msra.mxu0 %v1913
          %1953 = vmatprep.subr.bf16.mxu0 0
          %1954 = vmatpush1.bf16.msra.mxu0 %v1914
          %1955 = vmatprep.subr.bf16.mxu0 0
          %1956 = vmatpush1.bf16.msra.mxu0 %v1915
          %1957 = vmatprep.subr.bf16.mxu0 0
          %1958 = vmatpush1.bf16.msra.mxu0 %v1916
          %1959 = vmatprep.subr.bf16.mxu0 0
          %1960 = vmatpush1.bf16.msra.mxu0 %v1917
          %1961 = vmatprep.subr.bf16.mxu0 0
          %1962 = vmatpush1.bf16.msra.mxu0 %v1918
          %1963 = vmatprep.subr.bf16.mxu0 0
          %1964 = vmatpush1.bf16.msra.mxu0 %v1919
          %1965 = vmatprep.subr.bf16.mxu0 0
          %1966 = vmatpush1.bf16.msra.mxu0 %v1920
          %1967 = vmatprep.subr.bf16.mxu0 0
          %1968 = vmatpush1.bf16.msra.mxu0 %v1921
          %1969 = vmatprep.subr.bf16.mxu0 0
          %1970 = vmatpush1.bf16.msra.mxu0 %v1922
          %1971 = vmatprep.mubr.bf16.mxu0 %v1812
          %1972 = vmatmul.mubr.bf16.gmra.mrb[0].mxu0 %v1811
          %v1973 = vpop.f32.mrb[0].mxu0
          %v1974 = vadd.f32 0.0, %v1973
          %v1975 = vpop.f32.mrb[0].mxu0
          %v1976 = vpop.f32.mrb[0].mxu0
          %v1977 = vadd.f32 0.0, %v1976
          %v1978 = vpop.f32.mrb[0].mxu0
          %1979 = vmatprep.mubr.bf16.mxu0 %v1814
          %1980 = vmatmul.mubr.bf16.gmra.mrb[0].mxu0 %v1813
          %v1981 = vpop.f32.mrb[0].mxu0
          %v1982 = vadd.f32 0.0, %v1981
          %v1983 = vpop.f32.mrb[0].mxu0
          %v1984 = vpop.f32.mrb[0].mxu0
          %v1985 = vadd.f32 0.0, %v1984
          %v1986 = vpop.f32.mrb[0].mxu0
          %1987 = vmatprep.mubr.bf16.mxu0 %v1816
          %1988 = vmatmul.mubr.bf16.gmra.mrb[0].mxu0 %v1815
          %v1989 = vpop.f32.mrb[0].mxu0
          %v1990 = vadd.f32 0.0, %v1989
          %v1991 = vpop.f32.mrb[0].mxu0
          %v1992 = vpop.f32.mrb[0].mxu0
          %v1993 = vadd.f32 0.0, %v1992
          %v1994 = vpop.f32.mrb[0].mxu0
          %1995 = vmatprep.mubr.bf16.mxu0 %v1818
          %1996 = vmatmul.mubr.bf16.gmra.mrb[0].mxu0 %v1817
          %v1997 = vpop.f32.mrb[0].mxu0
          %v1998 = vadd.f32 0.0, %v1997
          %v1999 = vpop.f32.mrb[0].mxu0
          %v2000 = vpop.f32.mrb[0].mxu0
          %v2001 = vadd.f32 0.0, %v2000
          %v2002 = vpop.f32.mrb[0].mxu0
          %2003 = vmatprep.mubr.bf16.mxu0 %v1820
          %2004 = vmatmul.mubr.bf16.gmra.mrb[0].mxu0 %v1819
          %v2005 = vpop.f32.mrb[0].mxu0
          %v2006 = vadd.f32 0.0, %v2005
          %v2007 = vpop.f32.mrb[0].mxu0
          %v2008 = vpop.f32.mrb[0].mxu0
          %v2009 = vadd.f32 0.0, %v2008
          %v2010 = vpop.f32.mrb[0].mxu0
          %2011 = vmatprep.mubr.bf16.mxu0 %v1822
          %2012 = vmatmul.mubr.bf16.gmra.mrb[0].mxu0 %v1821
          %v2013 = vpop.f32.mrb[0].mxu0
          %v2014 = vadd.f32 0.0, %v2013
          %v2015 = vpop.f32.mrb[0].mxu0
          %v2016 = vpop.f32.mrb[0].mxu0
          %v2017 = vadd.f32 0.0, %v2016
          %v2018 = vpop.f32.mrb[0].mxu0
          %2019 = vmatprep.mubr.bf16.mxu0 %v1824
          %2020 = vmatmul.mubr.bf16.gmra.mrb[0].mxu0 %v1823
          %v2021 = vpop.f32.mrb[0].mxu0
          %v2022 = vadd.f32 0.0, %v2021
          %v2023 = vpop.f32.mrb[0].mxu0
          %v2024 = vpop.f32.mrb[0].mxu0
          %v2025 = vadd.f32 0.0, %v2024
          %v2026 = vpop.f32.mrb[0].mxu0
          %2027 = vmatprep.mubr.bf16.mxu0 %v1826
          %2028 = vmatmul.mubr.bf16.gmra.mrb[0].mxu0 %v1825
          %v2029 = vpop.f32.mrb[0].mxu0
          %v2030 = vadd.f32 0.0, %v2029
          %v2031 = vpop.f32.mrb[0].mxu0
          %v2032 = vpop.f32.mrb[0].mxu0
          %v2033 = vadd.f32 0.0, %v2032
          %v2034 = vpop.f32.mrb[0].mxu0
          %2035 = vmatprep.mubr.bf16.mxu0 %v1828
          %2036 = vmatmul.mubr.bf16.gmra.mrb[0].mxu0 %v1827
          %v2037 = vpop.f32.mrb[0].mxu0
          %v2038 = vadd.f32 0.0, %v2037
          %v2039 = vpop.f32.mrb[0].mxu0
          %v2040 = vpop.f32.mrb[0].mxu0
          %v2041 = vadd.f32 0.0, %v2040
          %v2042 = vpop.f32.mrb[0].mxu0
          %2043 = vmatprep.mubr.bf16.mxu0 %v1830
          %2044 = vmatmul.mubr.bf16.gmra.mrb[0].mxu0 %v1829
          %v2045 = vpop.f32.mrb[0].mxu0
          %v2046 = vadd.f32 0.0, %v2045
          %v2047 = vpop.f32.mrb[0].mxu0
          %v2048 = vpop.f32.mrb[0].mxu0
          %v2049 = vadd.f32 0.0, %v2048
          %v2050 = vpop.f32.mrb[0].mxu0
          %2051 = vmatprep.mubr.bf16.mxu0 %v1832
          %2052 = vmatmul.mubr.bf16.gmra.mrb[0].mxu0 %v1831
          %v2053 = vpop.f32.mrb[0].mxu0
          %v2054 = vadd.f32 0.0, %v2053
          %v2055 = vpop.f32.mrb[0].mxu0
          %v2056 = vpop.f32.mrb[0].mxu0
          %v2057 = vadd.f32 0.0, %v2056
          %v2058 = vpop.f32.mrb[0].mxu0
          %2059 = vmatprep.mubr.bf16.mxu0 %v1834
          %2060 = vmatmul.mubr.bf16.gmra.mrb[0].mxu0 %v1833
          %v2061 = vpop.f32.mrb[0].mxu0
          %v2062 = vadd.f32 0.0, %v2061
          %v2063 = vpop.f32.mrb[0].mxu0
          %v2064 = vpop.f32.mrb[0].mxu0
          %v2065 = vadd.f32 0.0, %v2064
          %v2066 = vpop.f32.mrb[0].mxu0
          %2067 = vmatprep.mubr.bf16.mxu0 %v1836
          %2068 = vmatmul.mubr.bf16.gmra.mrb[0].mxu0 %v1835
          %v2069 = vpop.f32.mrb[0].mxu0
          %v2070 = vadd.f32 0.0, %v2069
          %v2071 = vpop.f32.mrb[0].mxu0
          %v2072 = vpop.f32.mrb[0].mxu0
          %v2073 = vadd.f32 0.0, %v2072
          %v2074 = vpop.f32.mrb[0].mxu0
          %2075 = vmatprep.mubr.bf16.mxu0 %v1838
          %2076 = vmatmul.mubr.bf16.gmra.mrb[0].mxu0 %v1837
          %v2077 = vpop.f32.mrb[0].mxu0
          %v2078 = vadd.f32 0.0, %v2077
          %v2079 = vpop.f32.mrb[0].mxu0
          %v2080 = vpop.f32.mrb[0].mxu0
          %v2081 = vadd.f32 0.0, %v2080
          %v2082 = vpop.f32.mrb[0].mxu0
          %2083 = vmatprep.mubr.bf16.mxu0 %v1840
          %2084 = vmatmul.mubr.bf16.gmra.mrb[0].mxu0 %v1839
          %v2085 = vpop.f32.mrb[0].mxu0
          %v2086 = vadd.f32 0.0, %v2085
          %v2087 = vpop.f32.mrb[0].mxu0
          %v2088 = vpop.f32.mrb[0].mxu0
          %v2089 = vadd.f32 0.0, %v2088
          %v2090 = vpop.f32.mrb[0].mxu0
          %2091 = vmatprep.mubr.bf16.mxu0 %v1842
          %2092 = vmatmul.mubr.bf16.gmra.mrb[0].mxu0 %v1841
          %v2093 = vpop.f32.mrb[0].mxu0
          %v2094 = vadd.f32 0.0, %v2093
          %v2095 = vpop.f32.mrb[0].mxu0
          %v2096 = vpop.f32.mrb[0].mxu0
          %v2097 = vadd.f32 0.0, %v2096
          %v2098 = vpop.f32.mrb[0].mxu0
          %2099 = vdwg.mxu0
          %v2100 = vsel %vm1683, 2147483649, %v1075
          %v2101 = vsel %vm1684, 2147483649, %v1076
          %v2102 = vsel %vm1685, 2147483649, %v1077
          %v2103 = vsel %vm1686, 2147483649, %v1078
          %v2104 = vsel %vm1687, 2147483649, %v1079
          %v2105 = vsel %vm1688, 2147483649, %v1080
          %v2106 = vsel %vm1689, 2147483649, %v1081
          %v2107 = vsel %vm1690, 2147483649, %v1082
          %v2108 = vsel %vm1691, 2147483649, %v1083
          %v2109 = vsel %vm1692, 2147483649, %v1084
          %v2110 = vsel %vm1693, 2147483649, %v1085
          %v2111 = vsel %vm1694, 2147483649, %v1086
          %v2112 = vsel %vm1695, 2147483649, %v1087
          %v2113 = vsel %vm1696, 2147483649, %v1088
          %v2114 = vsel %vm1697, 2147483649, %v1089
          %v2115 = vsel %vm1698, 2147483649, %v1090
          %v2116 = vsel %vm1699, 2147483649, %v1091
          %v2117 = vsel %vm1700, 2147483649, %v1092
          %v2118 = vsel %vm1701, 2147483649, %v1093
          %v2119 = vsel %vm1702, 2147483649, %v1094
          %v2120 = vsel %vm1703, 2147483649, %v1095
          %v2121 = vsel %vm1704, 2147483649, %v1096
          %v2122 = vsel %vm1705, 2147483649, %v1097
          %v2123 = vsel %vm1706, 2147483649, %v1098
          %v2124 = vsel %vm1707, 2147483649, %v1099
          %v2125 = vsel %vm1708, 2147483649, %v1100
          %v2126 = vsel %vm1709, 2147483649, %v1101
          %v2127 = vsel %vm1710, 2147483649, %v1102
          %v2128 = vsel %vm1711, 2147483649, %v1103
          %v2129 = vsel %vm1712, 2147483649, %v1104
          %v2130 = vsel %vm1713, 2147483649, %v1105
          %v2131 = vsel %vm1714, 2147483649, %v1106
          %v2132 = vsel %vm1715, 2147483649, %v1107
          %v2133 = vsel %vm1716, 2147483649, %v1108
          %v2134 = vsel %vm1717, 2147483649, %v1109
          %v2135 = vsel %vm1718, 2147483649, %v1110
          %v2136 = vsel %vm1719, 2147483649, %v1111
          %v2137 = vsel %vm1720, 2147483649, %v1112
          %v2138 = vsel %vm1721, 2147483649, %v1113
          %v2139 = vsel %vm1722, 2147483649, %v1114
          %v2140 = vsel %vm1723, 2147483649, %v1115
          %v2141 = vsel %vm1724, 2147483649, %v1116
          %v2142 = vsel %vm1725, 2147483649, %v1117
          %v2143 = vsel %vm1726, 2147483649, %v1118
          %v2144 = vsel %vm1727, 2147483649, %v1119
          %v2145 = vsel %vm1728, 2147483649, %v1120
          %v2146 = vsel %vm1729, 2147483649, %v1121
          %v2147 = vsel %vm1730, 2147483649, %v1122
          %v2148 = vsel %vm1731, 2147483649, %v1123
          %v2149 = vsel %vm1732, 2147483649, %v1124
          %v2150 = vsel %vm1733, 2147483649, %v1125
          %v2151 = vsel %vm1734, 2147483649, %v1126
          %v2152 = vsel %vm1735, 2147483649, %v1127
          %v2153 = vsel %vm1736, 2147483649, %v1128
          %v2154 = vsel %vm1737, 2147483649, %v1129
          %v2155 = vsel %vm1738, 2147483649, %v1130
          %v2156 = vsel %vm1739, 2147483649, %v1131
          %v2157 = vsel %vm1740, 2147483649, %v1132
          %v2158 = vsel %vm1741, 2147483649, %v1133
          %v2159 = vsel %vm1742, 2147483649, %v1134
          %v2160 = vsel %vm1743, 2147483649, %v1135
          %v2161 = vsel %vm1744, 2147483649, %v1136
          %v2162 = vsel %vm1745, 2147483649, %v1137
          %v2163 = vsel %vm1746, 2147483649, %v1138
          %v2164 = vmax.f32 %v1139, %v1974
          %v2165 = vmax.f32 %v1140, %v1977
          %v2166 = vmax.f32 %v1141, %v1982
          %v2167 = vmax.f32 %v1142, %v1985
          %v2168 = vmax.f32 %v1143, %v1990
          %v2169 = vmax.f32 %v1144, %v1993
          %v2170 = vmax.f32 %v1145, %v1998
          %v2171 = vmax.f32 %v1146, %v2001
          %v2172 = vmax.f32 %v1147, %v2006
          %v2173 = vmax.f32 %v1148, %v2009
          %v2174 = vmax.f32 %v1149, %v2014
          %v2175 = vmax.f32 %v1150, %v2017
          %v2176 = vmax.f32 %v1151, %v2022
          %v2177 = vmax.f32 %v1152, %v2025
          %v2178 = vmax.f32 %v1153, %v2030
          %v2179 = vmax.f32 %v1154, %v2033
          %v2180 = vmax.f32 %v1155, %v2038
          %v2181 = vmax.f32 %v1156, %v2041
          %v2182 = vmax.f32 %v1157, %v2046
          %v2183 = vmax.f32 %v1158, %v2049
          %v2184 = vmax.f32 %v1159, %v2054
          %v2185 = vmax.f32 %v1160, %v2057
          %v2186 = vmax.f32 %v1161, %v2062
          %v2187 = vmax.f32 %v1162, %v2065
          %v2188 = vmax.f32 %v1163, %v2070
          %v2189 = vmax.f32 %v1164, %v2073
          %v2190 = vmax.f32 %v1165, %v2078
          %v2191 = vmax.f32 %v1166, %v2081
          %v2192 = vmax.f32 %v1167, %v2086
          %v2193 = vmax.f32 %v1168, %v2089
          %v2194 = vmax.f32 %v1169, %v2094
          %v2195 = vmax.f32 %v1170, %v2097
        $region57: #{tpu_custom_call.1} parent=35 // loop_footer
          %s1074 = sadd.s32 1, %s1070
        $region58: #{tpu_custom_call.1} parent=35 // loop_footer_branch
          %1069 = sbr.rel target = $region54
        $region59: #{tpu_custom_call.1} parent=35 // loop_exit
          _
        %v2196 = vld [vmem:[%s315] sm:$0xff]
        %v2197 = vld [vmem:[%s315 + $0x8] sm:$0xff]
        %v2198 = vld [vmem:[%s315 + $0x10] sm:$0xff]
        %v2199 = vld [vmem:[%s315 + $0x18] sm:$0xff]
        %v2200 = vld [vmem:[%s315 + $0x20] sm:$0xff]
        %v2201 = vld [vmem:[%s315 + $0x28] sm:$0xff]
        %v2202 = vld [vmem:[%s315 + $0x30] sm:$0xff]
        %v2203 = vld [vmem:[%s315 + $0x38] sm:$0xff]
        %v2204 = vld [vmem:[%s315 + $0x40] sm:$0xff]
        %v2205 = vld [vmem:[%s315 + $0x48] sm:$0xff]
        %v2206 = vld [vmem:[%s315 + $0x50] sm:$0xff]
        %v2207 = vld [vmem:[%s315 + $0x58] sm:$0xff]
        %v2208 = vld [vmem:[%s315 + $0x60] sm:$0xff]
        %v2209 = vld [vmem:[%s315 + $0x68] sm:$0xff]
        %v2210 = vld [vmem:[%s315 + $0x70] sm:$0xff]
        %v2211 = vld [vmem:[%s315 + $0x78] sm:$0xff]
        %v2212 = vld [vmem:[%s315 + $0x80] sm:$0xff]
        %v2213 = vld [vmem:[%s315 + $0x88] sm:$0xff]
        %v2214 = vld [vmem:[%s315 + $0x90] sm:$0xff]
        %v2215 = vld [vmem:[%s315 + $0x98] sm:$0xff]
        %v2216 = vld [vmem:[%s315 + $0xa0] sm:$0xff]
        %v2217 = vld [vmem:[%s315 + $0xa8] sm:$0xff]
        %v2218 = vld [vmem:[%s315 + $0xb0] sm:$0xff]
        %v2219 = vld [vmem:[%s315 + $0xb8] sm:$0xff]
        %v2220 = vld [vmem:[%s315 + $0xc0] sm:$0xff]
        %v2221 = vld [vmem:[%s315 + $0xc8] sm:$0xff]
        %v2222 = vld [vmem:[%s315 + $0xd0] sm:$0xff]
        %v2223 = vld [vmem:[%s315 + $0xd8] sm:$0xff]
        %v2224 = vld [vmem:[%s315 + $0xe0] sm:$0xff]
        %v2225 = vld [vmem:[%s315 + $0xe8] sm:$0xff]
        %v2226 = vld [vmem:[%s315 + $0xf0] sm:$0xff]
        %v2227 = vld [vmem:[%s315 + $0xf8] sm:$0xff]
        %v2228 = vadd.f32 %v2196, %v1139
        %v2229 = vadd.f32 %v2197, %v1140
        %v2230 = vadd.f32 %v2198, %v1141
        %v2231 = vadd.f32 %v2199, %v1142
        %v2232 = vadd.f32 %v2200, %v1143
        %v2233 = vadd.f32 %v2201, %v1144
        %v2234 = vadd.f32 %v2202, %v1145
        %v2235 = vadd.f32 %v2203, %v1146
        %v2236 = vadd.f32 %v2204, %v1147
        %v2237 = vadd.f32 %v2205, %v1148
        %v2238 = vadd.f32 %v2206, %v1149
        %v2239 = vadd.f32 %v2207, %v1150
        %v2240 = vadd.f32 %v2208, %v1151
        %v2241 = vadd.f32 %v2209, %v1152
        %v2242 = vadd.f32 %v2210, %v1153
        %v2243 = vadd.f32 %v2211, %v1154
        %v2244 = vadd.f32 %v2212, %v1155
        %v2245 = vadd.f32 %v2213, %v1156
        %v2246 = vadd.f32 %v2214, %v1157
        %v2247 = vadd.f32 %v2215, %v1158
        %v2248 = vadd.f32 %v2216, %v1159
        %v2249 = vadd.f32 %v2217, %v1160
        %v2250 = vadd.f32 %v2218, %v1161
        %v2251 = vadd.f32 %v2219, %v1162
        %v2252 = vadd.f32 %v2220, %v1163
        %v2253 = vadd.f32 %v2221, %v1164
        %v2254 = vadd.f32 %v2222, %v1165
        %v2255 = vadd.f32 %v2223, %v1166
        %v2256 = vadd.f32 %v2224, %v1167
        %v2257 = vadd.f32 %v2225, %v1168
        %v2258 = vadd.f32 %v2226, %v1169
        %v2259 = vadd.f32 %v2227, %v1170
        %v2260 = vmax.f32 %v2228, 0.0
        %v2261 = vmax.f32 %v2229, 0.0
        %v2262 = vmax.f32 %v2230, 0.0
        %v2263 = vmax.f32 %v2231, 0.0
        %v2264 = vmax.f32 %v2232, 0.0
        %v2265 = vmax.f32 %v2233, 0.0
        %v2266 = vmax.f32 %v2234, 0.0
        %v2267 = vmax.f32 %v2235, 0.0
        %v2268 = vmax.f32 %v2236, 0.0
        %v2269 = vmax.f32 %v2237, 0.0
        %v2270 = vmax.f32 %v2238, 0.0
        %v2271 = vmax.f32 %v2239, 0.0
        %v2272 = vmax.f32 %v2240, 0.0
        %v2273 = vmax.f32 %v2241, 0.0
        %v2274 = vmax.f32 %v2242, 0.0
        %v2275 = vmax.f32 %v2243, 0.0
        %v2276 = vmax.f32 %v2244, 0.0
        %v2277 = vmax.f32 %v2245, 0.0
        %v2278 = vmax.f32 %v2246, 0.0
        %v2279 = vmax.f32 %v2247, 0.0
        %v2280 = vmax.f32 %v2248, 0.0
        %v2281 = vmax.f32 %v2249, 0.0
        %v2282 = vmax.f32 %v2250, 0.0
        %v2283 = vmax.f32 %v2251, 0.0
        %v2284 = vmax.f32 %v2252, 0.0
        %v2285 = vmax.f32 %v2253, 0.0
        %v2286 = vmax.f32 %v2254, 0.0
        %v2287 = vmax.f32 %v2255, 0.0
        %v2288 = vmax.f32 %v2256, 0.0
        %v2289 = vmax.f32 %v2257, 0.0
        %v2290 = vmax.f32 %v2258, 0.0
        %v2291 = vmax.f32 %v2259, 0.0
        %2292 = vst [vmem:[%s354] sm:$0xff] %v2260
        %2293 = vst [vmem:[%s354 + $0x8] sm:$0xff] %v2261
        %2294 = vst [vmem:[%s354 + $0x10] sm:$0xff] %v2262
        %2295 = vst [vmem:[%s354 + $0x18] sm:$0xff] %v2263
        %2296 = vst [vmem:[%s354 + $0x20] sm:$0xff] %v2264
        %2297 = vst [vmem:[%s354 + $0x28] sm:$0xff] %v2265
        %2298 = vst [vmem:[%s354 + $0x30] sm:$0xff] %v2266
        %2299 = vst [vmem:[%s354 + $0x38] sm:$0xff] %v2267
        %2300 = vst [vmem:[%s354 + $0x40] sm:$0xff] %v2268
        %2301 = vst [vmem:[%s354 + $0x48] sm:$0xff] %v2269
        %2302 = vst [vmem:[%s354 + $0x50] sm:$0xff] %v2270
        %2303 = vst [vmem:[%s354 + $0x58] sm:$0xff] %v2271
        %2304 = vst [vmem:[%s354 + $0x60] sm:$0xff] %v2272
        %2305 = vst [vmem:[%s354 + $0x68] sm:$0xff] %v2273
        %2306 = vst [vmem:[%s354 + $0x70] sm:$0xff] %v2274
        %2307 = vst [vmem:[%s354 + $0x78] sm:$0xff] %v2275
        %2308 = vst [vmem:[%s354 + $0x80] sm:$0xff] %v2276
        %2309 = vst [vmem:[%s354 + $0x88] sm:$0xff] %v2277
        %2310 = vst [vmem:[%s354 + $0x90] sm:$0xff] %v2278
        %2311 = vst [vmem:[%s354 + $0x98] sm:$0xff] %v2279
        %2312 = vst [vmem:[%s354 + $0xa0] sm:$0xff] %v2280
        %2313 = vst [vmem:[%s354 + $0xa8] sm:$0xff] %v2281
        %2314 = vst [vmem:[%s354 + $0xb0] sm:$0xff] %v2282
        %2315 = vst [vmem:[%s354 + $0xb8] sm:$0xff] %v2283
        %2316 = vst [vmem:[%s354 + $0xc0] sm:$0xff] %v2284
        %2317 = vst [vmem:[%s354 + $0xc8] sm:$0xff] %v2285
        %2318 = vst [vmem:[%s354 + $0xd0] sm:$0xff] %v2286
        %2319 = vst [vmem:[%s354 + $0xd8] sm:$0xff] %v2287
        %2320 = vst [vmem:[%s354 + $0xe0] sm:$0xff] %v2288
        %2321 = vst [vmem:[%s354 + $0xe8] sm:$0xff] %v2289
        %2322 = vst [vmem:[%s354 + $0xf0] sm:$0xff] %v2290
        %2323 = vst [vmem:[%s354 + $0xf8] sm:$0xff] %v2291
        %s2324 = sand.u32 %s157, 1
        %s2325 = scalar_lea.sflag [#allocation4], %s2324
        %s2326 = sand.u32 %s157, 1
        %s2327 = smul.addr %s2326, 256
        %s2328 = scalar_lea.vmem [#allocation10], %s2327
        // Predicated region
        $region60: #{tpu_custom_call.1} parent=35 // pred_check
          %p2329 = pneg %p167
        $region61: #{tpu_custom_call.1} parent=35 // pred_check_branch
          %2331 = sbr.rel (%p2329) target = $region63
        $region62: #{tpu_custom_call.1} parent=35 // pred_region
          %s2332 = smul.u32 32, %s32
          %s2334 = ssub.s32 4096, 4096
          %2335 = vsyncadd %s2325, %s2334
          %s2336 = smul.addr %s31, 32
          %s2337 = sadd.s32 %s2332, %s2336
          %s2338 = smul.addr %s2337, 128
          %s2339 = scalar_lea.hbm %s4, %s2338
          %s2340 = sshll.u32 %s2328, 4
          %s2341 = int_to_ptr.vmem [resolvable:$true] %s2340
          %2346 = dma.vmem_to_hbm [thread:$0]  %s2341, 4096, %s2339, %s2325, 128, 128, 8
        $region63: #{tpu_custom_call.1} parent=35 // pred_fallthru
          _
      $region36: #{tpu_custom_call.1} parent=5 // pred_fallthru
        _
      %p2347 = scmp.le.s32.totalorder 2, %s22
      // Predicated region
      $region64: #{tpu_custom_call.1} parent=5 // pred_check
        %p2348 = pneg %p2347
      $region65: #{tpu_custom_call.1} parent=5 // pred_check_branch
        %2350 = sbr.rel (%p2348) target = $region67
      $region66: #{tpu_custom_call.1} parent=5 // pred_region
        %s2351 = ssub.s32 %s22, 2
        // Predicated region
        $region68: #{tpu_custom_call.1} parent=66 // pred_check
          %p2352 = pneg %p173
        $region69: #{tpu_custom_call.1} parent=66 // pred_check_branch
          %2354 = sbr.rel (%p2352) target = $region71
        $region70: #{tpu_custom_call.1} parent=66 // pred_region
          %s2355 = sand.u32 %s158, 1
          %s2356 = scalar_lea.sflag [#allocation4], %s2355
          %s2357 = sand.u32 %s158, 1
          %s2358 = smul.addr %s2357, 256
          %s2359 = scalar_lea.vmem [#allocation10], %s2358
          %2360 = dma.done %s2356, 4096
        $region71: #{tpu_custom_call.1} parent=66 // pred_fallthru
          _
      $region67: #{tpu_custom_call.1} parent=5 // pred_fallthru
        _
    $region6: #{tpu_custom_call.1} parent=1 // loop_footer
      %s26 = sadd.s32 1, %s22
    $region7: #{tpu_custom_call.1} parent=1 // loop_footer_branch
      %21 = sbr.rel target = $region3
    $region8: #{tpu_custom_call.1} parent=1 // loop_exit
      _
    %2361 = vsyncpa [#allocation3], 1
    %s2362 = scalar_lea.sflag [#allocation3], 1
    %2363 = vsyncpa %s2362, 1
    %2364 = vsyncpa [#allocation6], 1
    %s2365 = scalar_lea.sflag [#allocation6], 1
    %2366 = vsyncpa %s2365, 1
    %2367 = vsyncpa [#allocation9], 1
    %s2368 = scalar_lea.sflag [#allocation9], 1
    %2369 = vsyncpa %s2368, 1
    %2370 = vsyncpa [#allocation4], 1
    %s2371 = scalar_lea.sflag [#allocation4], 1
    %2372 = vsyncpa %s2371, 1

</llo_original>
